<compile_context>
chip_gen: v6e
topology: v6e:2x2x1
jax: 0.10.0
libtpu: 0.0.40
codegen_flags: <defaults>
</compile_context>

<pallas_src>
import functools

import jax
import jax.numpy as jnp
from jax.experimental import pallas as pl
from jax.experimental.pallas import tpu as pltpu

_LANE = 128


def _round_up(x, m):
    return (x + m - 1) // m * m


def _conv_stats_kernel(x_ref, w_ref, y_ref, stats_ref, im2col_ref):
    # x_ref:      (1, H, W, Cin)        bf16 — full image; block index depends
    #                                   only on n, so it is DMA'd once per image
    #                                   and reused across the image's H-tiles.
    # w_ref:      (3, 3*Cin_p, Cout_p)  bf16 — kx folded into the K dim.
    # y_ref:      (1, TH, W, Cout_p)    bf16 — conv output tile (lane-dense).
    # stats_ref:  (1, 2, Cout_p)        f32  — per-image [sum, sum_sq]; block
    #                                   index depends only on n, so it stays
    #                                   resident in VMEM across the H-tiles.
    # im2col_ref: (H+2, W, 3*Cin_p)     bf16 scratch — row-im2col of the padded
    #                                   image (halo + channel zero-pad built in
    #                                   VMEM, not in HBM).
    h = pl.program_id(1)
    _, H, W, Cin = x_ref.shape
    _, TH, _, Cout_p = y_ref.shape
    Cin_p = w_ref.shape[1] // 3

    # Per-image init (first H-tile only): zero the stats accumulator and build
    # the im2col scratch once; it is reused by every H-tile of this image.
    @pl.when(h == 0)
    def _():
        stats_ref[...] = jnp.zeros_like(stats_ref)
        im2col_ref[...] = jnp.zeros_like(im2col_ref)
        x = x_ref[0]                                                   # (H, W, Cin)
        # Channel block kx holds x_pad[row, col + kx, :]; halo rows/cols stay 0.
        im2col_ref[1:H + 1, 1:W, 0:Cin] = x[:, 0:W - 1, :]             # kx = 0
        im2col_ref[1:H + 1, 0:W, Cin_p:Cin_p + Cin] = x                # kx = 1
        im2col_ref[1:H + 1, 0:W - 1, 2 * Cin_p:2 * Cin_p + Cin] = x[:, 1:W, :]  # kx = 2

    # 3x3 conv for this H-tile: 3 MXU matmuls (one per ky), K = 3*Cin_p.
    # The ky shift is along a major (non-sublane) axis, so the slices are cheap.
    h0 = h * TH
    acc = jnp.zeros((TH * W, Cout_p), jnp.float32)
    for ky in range(3):
        patch = im2col_ref[pl.ds(h0 + ky, TH), :, :].reshape(TH * W, 3 * Cin_p)
        acc = acc + jnp.dot(patch, w_ref[ky], preferred_element_type=jnp.float32)

    # Store the intermediate in bf16 (halves HBM traffic of pass-1 write and
    # pass-2 read); BN statistics use the f32 accumulator so mean/var keep
    # full precision.
    y_ref[...] = acc.reshape(1, TH, W, Cout_p).astype(y_ref.dtype)

    s = jnp.sum(acc, axis=0, keepdims=True)              # (1, Cout_p)
    ss = jnp.sum(acc * acc, axis=0, keepdims=True)       # (1, Cout_p)
    stats_ref[0] += jnp.concatenate([s, ss], axis=0)     # (2, Cout_p)


def _bn_relu_apply_kernel(y_ref, scale_ref, shift_ref, o_ref):
    # Single fused multiply-add + ReLU per element; per-channel scale/shift are
    # precomputed, so there is exactly one pass over y.
    scale = scale_ref[0][None, None, None, :]
    shift = shift_ref[0][None, None, None, :]
    y = y_ref[...].astype(jnp.float32)
    o_ref[...] = jnp.maximum(y * scale + shift, 0.0).astype(o_ref.dtype)


def _pick_block_h(H, W):
    # Largest divisor of H giving at most ~512 output pixels per tile.
    best = 1
    for th in range(1, H + 1):
        if H % th == 0 and th * W <= 512:
            best = th
    return best


def cna3x3_forward(x_nchw, w_oihw, bias, gamma, beta, *, block_h=None, eps=1e-5):
    del bias  # Conv bias cancels exactly against the BN batch-mean subtraction.

    N, Cin, H, W = x_nchw.shape
    Cout = w_oihw.shape[0]
    Cin_p = _round_up(Cin, _LANE)
    Cout_p = _round_up(Cout, _LANE)

    if block_h is None:
        block_h = _pick_block_h(H, W)
    TH = block_h
    assert H % TH == 0, "block_h must divide H"
    nH = H // TH

    # Boundary layout glue (the PyTorch module is NCHW): NHWC + bf16 for the
    # MXU.  No spatial/channel padding of the activation in HBM — halo and lane
    # padding are created inside the kernel's VMEM scratch.
    x_nhwc = jnp.transpose(x_nchw, (0, 2, 3, 1)).astype(jnp.bfloat16)

    # Weights: OIHW -> (ky, kx, Cin, Cout), zero-pad channels to 128 lanes and
    # fold kx into the contraction dim -> (3, 3*Cin_p, Cout_p).
    w_k = jnp.transpose(w_oihw, (2, 3, 1, 0))
    w_k = jnp.pad(w_k, ((0, 0), (0, 0), (0, Cin_p - Cin), (0, Cout_p - Cout)))
    w_fold = w_k.reshape(3, 3 * Cin_p, Cout_p).astype(jnp.bfloat16)

    # ---- Pass 1: conv3x3 with fused per-image BN statistics ------------------
    y, stats = pl.pallas_call(
        _conv_stats_kernel,
        out_shape=(
            jax.ShapeDtypeStruct((N, H, W, Cout_p), jnp.bfloat16),
            jax.ShapeDtypeStruct((N, 2, Cout_p), jnp.float32),
        ),
        grid=(N, nH),
        in_specs=[
            # Whole image per batch element; fetched once per image and reused
            # across its H-tiles.  NOTE: for very large H*W*Cin this (plus the
            # im2col scratch) would need halo-tiled input blocks to fit v7x's
            # 64 MiB VMEM.
            pl.BlockSpec((1, H, W, Cin), lambda n, h: (n, 0, 0, 0)),
            pl.BlockSpec((3, 3 * Cin_p, Cout_p), lambda n, h: (0, 0, 0)),
        ],
        out_specs=(
            pl.BlockSpec((1, TH, W, Cout_p), lambda n, h: (n, h, 0, 0)),
            # Stats block index depends only on n -> VMEM-resident accumulator
            # across the H axis; written back to HBM once per image.
            pl.BlockSpec((1, 2, Cout_p), lambda n, h: (n, 0, 0)),
        ),
        scratch_shapes=[pltpu.VMEM((H + 2, W, 3 * Cin_p), jnp.bfloat16)],
        compiler_params=pltpu.CompilerParams(
            # Batch axis parallel (megacore); the H axis must stay "arbitrary"
            # because the im2col scratch and stats block persist across H-tiles.
            dimension_semantics=("parallel", "arbitrary")),
    )(x_nhwc, w_fold)

    # ---- Tiny per-channel reduction: scale/shift from sum & sum-of-squares ---
    count = N * H * W
    ch_sum = jnp.sum(stats[:, 0, :], axis=0)
    ch_sumsq = jnp.sum(stats[:, 1, :], axis=0)
    mean = ch_sum / count
    var = jnp.maximum(ch_sumsq / count - mean * mean, 0.0)  # biased (BN training)
    gamma_p = jnp.pad(gamma.astype(jnp.float32), (0, Cout_p - Cout))
    beta_p = jnp.pad(beta.astype(jnp.float32), (0, Cout_p - Cout))
    scale = gamma_p * jax.lax.rsqrt(var + eps)
    shift = beta_p - mean * scale

    # ---- Pass 2: gridded, pipelined scale*y + shift, then ReLU ----------------
    out_nhwc = pl.pallas_call(
        _bn_relu_apply_kernel,
        out_shape=jax.ShapeDtypeStruct((N, H, W, Cout_p), jnp.float32),
        grid=(N, nH),
        in_specs=[
            pl.BlockSpec((1, TH, W, Cout_p), lambda n, h: (n, h, 0, 0)),
            pl.BlockSpec((1, Cout_p), lambda n, h: (0, 0)),
            pl.BlockSpec((1, Cout_p), lambda n, h: (0, 0)),
        ],
        out_specs=pl.BlockSpec((1, TH, W, Cout_p), lambda n, h: (n, h, 0, 0)),
        compiler_params=pltpu.CompilerParams(
            dimension_semantics=("parallel", "parallel")),
    )(y, scale.reshape(1, Cout_p), shift.reshape(1, Cout_p))

    # Back to the module's NCHW interface, dropping padded channels.
    return jnp.transpose(out_nhwc[..., :Cout], (0, 3, 1, 2))


def _reference(x_nchw, w_oihw, bias, gamma, beta):
    # Pure-JAX f32 reference (conv + bias + training-mode BN + ReLU).
    y = jax.lax.conv_general_dilated(
        x_nchw, w_oihw, window_strides=(1, 1), padding=((1, 1), (1, 1)),
        dimension_numbers=("NCHW", "OIHW", "NCHW"))
    y = y + bias[None, :, None, None]
    mean = jnp.mean(y, axis=(0, 2, 3), keepdims=True)
    var = jnp.mean((y - mean) ** 2, axis=(0, 2, 3), keepdims=True)
    y = (y - mean) * jax.lax.rsqrt(var + 1e-5)
    y = y * gamma[None, :, None, None] + beta[None, :, None, None]
    return jnp.maximum(y, 0.0)


if __name__ == "__main__":
    key = jax.random.PRNGKey(0)
    k_x, k_w, k_b, k_g, k_be = jax.random.split(key, 5)

    N, in_ch, out_ch, HW = 2, 4, 8, 16
    x = jax.random.normal(k_x, (N, in_ch, HW, HW), dtype=jnp.float32)
    w = jax.random.normal(k_w, (out_ch, in_ch, 3, 3), dtype=jnp.float32) * 0.1
    b = jax.random.normal(k_b, (out_ch,), dtype=jnp.float32) * 0.1
    gamma = 1.0 + 0.1 * jax.random.normal(k_g, (out_ch,), dtype=jnp.float32)
    beta = 0.1 * jax.random.normal(k_be, (out_ch,), dtype=jnp.float32)

    fwd = jax.jit(functools.partial(cna3x3_forward, block_h=8))
    out = jax.block_until_ready(fwd(x, w, b, gamma, beta))

    ref = _reference(x, w, b, gamma, beta)
    assert out.shape == (N, out_ch, HW, HW)
    max_err = float(jnp.max(jnp.abs(out - ref)))
    # bf16 MXU inputs + bf16 intermediate storage (f32 accumulation / f32 BN
    # stats) -> compare at bf16-level tolerance.
    assert jnp.allclose(out, ref, rtol=4e-2, atol=4e-2), (
        f"mismatch vs reference (max abs err {max_err})")
    print("KERNEL_OK")
</pallas_src>

<mosaic_0001>
module attributes {stable_mosaic.version = 11 : i64} {
  func.func @_conv_stats_kernel(%arg0: i32, %arg1: i32, %arg2: memref<1x16x16x4xbf16, #tpu.memory_space<vmem>>, %arg3: memref<3x384x128xbf16, #tpu.memory_space<vmem>>, %arg4: memref<1x8x16x128xbf16, #tpu.memory_space<vmem>>, %arg5: memref<1x2x128xf32, #tpu.memory_space<vmem>>, %arg6: memref<18x16x384xbf16, #tpu.memory_space<vmem>>) attributes {dimension_semantics = [#tpu.dimension_semantics<parallel>, #tpu.dimension_semantics<arbitrary>], iteration_bounds = array<i64: 2, 2>, scalar_prefetch = 0 : i64, scratch_operands = 1 : i64, tpu.core_type = #tpu.core_type<tc>, window_params = [{transform_indices = @transform_0, window_bounds = array<i64: 1, 16, 16, 4>}, {pipeline_mode = #tpu.pipeline_mode<synchronous>, transform_indices = @transform_1, window_bounds = array<i64: 3, 384, 128>}, {transform_indices = @transform_2, window_bounds = array<i64: 1, 8, 16, 128>}, {transform_indices = @transform_3, window_bounds = array<i64: 1, 2, 128>}]} {
    %c0_i32 = arith.constant 0 : i32
    %0 = arith.cmpi eq, %arg1, %c0_i32 : i32
    %1 = arith.extui %0 : i1 to i32
    %c0_i32_0 = arith.constant 0 : i32
    %2 = arith.cmpi ne, %1, %c0_i32_0 : i32
    scf.if %2 {
      %cst_29 = arith.constant 0.000000e+00 : f32
      %44 = vector.broadcast %cst_29 : f32 to vector<1x2x128xf32>
      %c0_30 = arith.constant 0 : index
      %c0_31 = arith.constant 0 : index
      %c0_32 = arith.constant 0 : index
      %45 = vector.load %arg5[%c0_30, %c0_31, %c0_32] : memref<1x2x128xf32, #tpu.memory_space<vmem>>, vector<1x2x128xf32>
      tpu.vector_store %arg5[%c0_30, %c0_31, %c0_32], %44 {strides = array<i32>} : memref<1x2x128xf32, #tpu.memory_space<vmem>>, vector<1x2x128xf32>,
      %cst_33 = arith.constant 0.000000e+00 : bf16
      %46 = vector.broadcast %cst_33 : bf16 to vector<18x16x384xbf16>
      %c0_34 = arith.constant 0 : index
      %c0_35 = arith.constant 0 : index
      %c0_36 = arith.constant 0 : index
      %47 = vector.load %arg6[%c0_34, %c0_35, %c0_36] : memref<18x16x384xbf16, #tpu.memory_space<vmem>>, vector<18x16x384xbf16>
      tpu.vector_store %arg6[%c0_34, %c0_35, %c0_36], %46 {strides = array<i32>} : memref<18x16x384xbf16, #tpu.memory_space<vmem>>, vector<18x16x384xbf16>,
      %c0_37 = arith.constant 0 : index
      %c0_38 = arith.constant 0 : index
      %c0_39 = arith.constant 0 : index
      %c0_40 = arith.constant 0 : index
      %48 = vector.load %arg2[%c0_37, %c0_38, %c0_39, %c0_40] : memref<1x16x16x4xbf16, #tpu.memory_space<vmem>>, vector<1x16x16x4xbf16>
      %49 = vector.shape_cast %48 : vector<1x16x16x4xbf16> to vector<16x16x4xbf16>
      %50 = vector.extract_strided_slice %49 {offsets = [0, 0, 0], sizes = [16, 15, 4], strides = [1, 1, 1]} : vector<16x16x4xbf16> to vector<16x15x4xbf16>
      %c1_41 = arith.constant 1 : index
      %c1_42 = arith.constant 1 : index
      %c0_43 = arith.constant 0 : index
      %51 = vector.load %arg6[%c1_41, %c1_42, %c0_43] : memref<18x16x384xbf16, #tpu.memory_space<vmem>>, vector<16x15x4xbf16>
      tpu.vector_store %arg6[%c1_41, %c1_42, %c0_43], %50 {strides = array<i32>} : memref<18x16x384xbf16, #tpu.memory_space<vmem>>, vector<16x15x4xbf16>,
      %c1_44 = arith.constant 1 : index
      %c0_45 = arith.constant 0 : index
      %c128 = arith.constant 128 : index
      %52 = vector.load %arg6[%c1_44, %c0_45, %c128] : memref<18x16x384xbf16, #tpu.memory_space<vmem>>, vector<16x16x4xbf16>
      tpu.vector_store %arg6[%c1_44, %c0_45, %c128], %49 {strides = array<i32>} : memref<18x16x384xbf16, #tpu.memory_space<vmem>>, vector<16x16x4xbf16>,
      %53 = vector.extract_strided_slice %49 {offsets = [0, 1, 0], sizes = [16, 15, 4], strides = [1, 1, 1]} : vector<16x16x4xbf16> to vector<16x15x4xbf16>
      %c1_46 = arith.constant 1 : index
      %c0_47 = arith.constant 0 : index
      %c256 = arith.constant 256 : index
      %54 = vector.load %arg6[%c1_46, %c0_47, %c256] : memref<18x16x384xbf16, #tpu.memory_space<vmem>>, vector<16x15x4xbf16>
      tpu.vector_store %arg6[%c1_46, %c0_47, %c256], %53 {strides = array<i32>} : memref<18x16x384xbf16, #tpu.memory_space<vmem>>, vector<16x15x4xbf16>,
    } else {
    }
    %c8_i32 = arith.constant 8 : i32
    %3 = arith.muli %arg1, %c8_i32 : i32
    %cst = arith.constant 0.000000e+00 : f32
    %4 = vector.broadcast %cst : f32 to vector<128x128xf32>
    %c0_i32_1 = arith.constant 0 : i32
    %5 = arith.addi %3, %c0_i32_1 : i32
    %6 = arith.index_cast %5 : i32 to index
    %c0 = arith.constant 0 : index
    %c0_2 = arith.constant 0 : index
    %7 = vector.load %arg6[%6, %c0, %c0_2] : memref<18x16x384xbf16, #tpu.memory_space<vmem>>, vector<8x16x384xbf16>
    %8 = vector.shape_cast %7 : vector<8x16x384xbf16> to vector<128x384xbf16>
    %c0_3 = arith.constant 0 : index
    %c0_4 = arith.constant 0 : index
    %c0_5 = arith.constant 0 : index
    %9 = vector.load %arg3[%c0_3, %c0_4, %c0_5] : memref<3x384x128xbf16, #tpu.memory_space<vmem>>, vector<1x384x128xbf16>
    %10 = vector.shape_cast %9 : vector<1x384x128xbf16> to vector<384x128xbf16>
    %cst_6 = arith.constant dense<0.000000e+00> : vector<128x128xf32>
    %11 = tpu.matmul %8, %10, %cst_6 {dimension_numbers = #tpu.dot_dimension_numbers<[1], [0], [0], [1], [0, 0, 1, 1], [], []>} : vector<128x384xbf16>, vector<384x128xbf16>, vector<128x128xf32> -> vector<128x128xf32>
    %12 = arith.addf %4, %11 : vector<128x128xf32>
    %c1_i32 = arith.constant 1 : i32
    %13 = arith.addi %3, %c1_i32 : i32
    %14 = arith.index_cast %13 : i32 to index
    %c0_7 = arith.constant 0 : index
    %c0_8 = arith.constant 0 : index
    %15 = vector.load %arg6[%14, %c0_7, %c0_8] : memref<18x16x384xbf16, #tpu.memory_space<vmem>>, vector<8x16x384xbf16>
    %16 = vector.shape_cast %15 : vector<8x16x384xbf16> to vector<128x384xbf16>
    %c1 = arith.constant 1 : index
    %c0_9 = arith.constant 0 : index
    %c0_10 = arith.constant 0 : index
    %17 = vector.load %arg3[%c1, %c0_9, %c0_10] : memref<3x384x128xbf16, #tpu.memory_space<vmem>>, vector<1x384x128xbf16>
    %18 = vector.shape_cast %17 : vector<1x384x128xbf16> to vector<384x128xbf16>
    %cst_11 = arith.constant dense<0.000000e+00> : vector<128x128xf32>
    %19 = tpu.matmul %16, %18, %cst_11 {dimension_numbers = #tpu.dot_dimension_numbers<[1], [0], [0], [1], [0, 0, 1, 1], [], []>} : vector<128x384xbf16>, vector<384x128xbf16>, vector<128x128xf32> -> vector<128x128xf32>
    %20 = arith.addf %12, %19 : vector<128x128xf32>
    %c2_i32 = arith.constant 2 : i32
    %21 = arith.addi %3, %c2_i32 : i32
    %22 = arith.index_cast %21 : i32 to index
    %c0_12 = arith.constant 0 : index
    %c0_13 = arith.constant 0 : index
    %23 = vector.load %arg6[%22, %c0_12, %c0_13] : memref<18x16x384xbf16, #tpu.memory_space<vmem>>, vector<8x16x384xbf16>
    %24 = vector.shape_cast %23 : vector<8x16x384xbf16> to vector<128x384xbf16>
    %c2 = arith.constant 2 : index
    %c0_14 = arith.constant 0 : index
    %c0_15 = arith.constant 0 : index
    %25 = vector.load %arg3[%c2, %c0_14, %c0_15] : memref<3x384x128xbf16, #tpu.memory_space<vmem>>, vector<1x384x128xbf16>
    %26 = vector.shape_cast %25 : vector<1x384x128xbf16> to vector<384x128xbf16>
    %cst_16 = arith.constant dense<0.000000e+00> : vector<128x128xf32>
    %27 = tpu.matmul %24, %26, %cst_16 {dimension_numbers = #tpu.dot_dimension_numbers<[1], [0], [0], [1], [0, 0, 1, 1], [], []>} : vector<128x384xbf16>, vector<384x128xbf16>, vector<128x128xf32> -> vector<128x128xf32>
    %28 = arith.addf %20, %27 : vector<128x128xf32>
    %29 = vector.shape_cast %28 : vector<128x128xf32> to vector<1x8x16x128xf32>
    %30 = arith.truncf %29 : vector<1x8x16x128xf32> to vector<1x8x16x128xbf16>
    %c0_17 = arith.constant 0 : index
    %c0_18 = arith.constant 0 : index
    %c0_19 = arith.constant 0 : index
    %c0_20 = arith.constant 0 : index
    %31 = vector.load %arg4[%c0_17, %c0_18, %c0_19, %c0_20] : memref<1x8x16x128xbf16, #tpu.memory_space<vmem>>, vector<1x8x16x128xbf16>
    tpu.vector_store %arg4[%c0_17, %c0_18, %c0_19, %c0_20], %30 {strides = array<i32>} : memref<1x8x16x128xbf16, #tpu.memory_space<vmem>>, vector<1x8x16x128xbf16>,
    %cst_21 = arith.constant dense<0.000000e+00> : vector<128xf32>
    %32 = vector.multi_reduction <add>, %28, %cst_21 [0] : vector<128x128xf32> to vector<128xf32>
    %33 = vector.shape_cast %32 : vector<128xf32> to vector<1x128xf32>
    %34 = arith.mulf %28, %28 : vector<128x128xf32>
    %cst_22 = arith.constant dense<0.000000e+00> : vector<128xf32>
    %35 = vector.multi_reduction <add>, %34, %cst_22 [0] : vector<128x128xf32> to vector<128xf32>
    %36 = vector.shape_cast %35 : vector<128xf32> to vector<1x128xf32>
    %c0_23 = arith.constant 0 : index
    %c0_24 = arith.constant 0 : index
    %c0_25 = arith.constant 0 : index
    %37 = vector.load %arg5[%c0_23, %c0_24, %c0_25] : memref<1x2x128xf32, #tpu.memory_space<vmem>>, vector<1x2x128xf32>
    %38 = vector.shape_cast %37 : vector<1x2x128xf32> to vector<2x128xf32>
    %39 = tpu.concatenate %33, %36 in 0 : vector<1x128xf32>, vector<1x128xf32> -> vector<2x128xf32>
    %40 = arith.addf %38, %39 : vector<2x128xf32>
    %c0_26 = arith.constant 0 : index
    %c0_27 = arith.constant 0 : index
    %c0_28 = arith.constant 0 : index
    %41 = vector.load %arg5[%c0_26, %c0_27, %c0_28] : memref<1x2x128xf32, #tpu.memory_space<vmem>>, vector<1x2x128xf32>
    %42 = vector.shape_cast %41 : vector<1x2x128xf32> to vector<2x128xf32>
    %43 = vector.shape_cast %40 : vector<2x128xf32> to vector<1x2x128xf32>
    tpu.vector_store %arg5[%c0_26, %c0_27, %c0_28], %43 {strides = array<i32>} : memref<1x2x128xf32, #tpu.memory_space<vmem>>, vector<1x2x128xf32>,
    return
  }
  func.func @transform_0(%arg0: i32, %arg1: i32) -> (i32, i32, i32, i32) {
    %c0_i32 = arith.constant 0 : i32
    %c0_i32_0 = arith.constant 0 : i32
    %c0_i32_1 = arith.constant 0 : i32
    %c0_i32_2 = arith.constant 0 : i32
    return %arg0, %c0_i32, %c0_i32_0, %c0_i32_1 : i32, i32, i32, i32
  }
  func.func @transform_1(%arg0: i32, %arg1: i32) -> (i32, i32, i32) {
    %c0_i32 = arith.constant 0 : i32
    %c0_i32_0 = arith.constant 0 : i32
    %c0_i32_1 = arith.constant 0 : i32
    %c0_i32_2 = arith.constant 0 : i32
    return %c0_i32, %c0_i32_0, %c0_i32_1 : i32, i32, i32
  }
  func.func @transform_2(%arg0: i32, %arg1: i32) -> (i32, i32, i32, i32) {
    %c0_i32 = arith.constant 0 : i32
    %c0_i32_0 = arith.constant 0 : i32
    %c0_i32_1 = arith.constant 0 : i32
    return %arg0, %arg1, %c0_i32, %c0_i32_0 : i32, i32, i32, i32
  }
  func.func @transform_3(%arg0: i32, %arg1: i32) -> (i32, i32, i32) {
    %c0_i32 = arith.constant 0 : i32
    %c0_i32_0 = arith.constant 0 : i32
    %c0_i32_1 = arith.constant 0 : i32
    return %arg0, %c0_i32, %c0_i32_0 : i32, i32, i32
  }
}

module attributes {stable_mosaic.version = 11 : i64} {
  func.func @_bn_relu_apply_kernel(%arg0: i32, %arg1: i32, %arg2: memref<1x8x16x128xbf16, #tpu.memory_space<vmem>>, %arg3: memref<1x128xf32, #tpu.memory_space<vmem>>, %arg4: memref<1x128xf32, #tpu.memory_space<vmem>>, %arg5: memref<1x8x16x128xf32, #tpu.memory_space<vmem>>) attributes {dimension_semantics = [#tpu.dimension_semantics<parallel>, #tpu.dimension_semantics<parallel>], iteration_bounds = array<i64: 2, 2>, scalar_prefetch = 0 : i64, scratch_operands = 0 : i64, tpu.core_type = #tpu.core_type<tc>, window_params = [{transform_indices = @transform_0, window_bounds = array<i64: 1, 8, 16, 128>}, {pipeline_mode = #tpu.pipeline_mode<synchronous>, transform_indices = @transform_1, window_bounds = array<i64: 1, 128>}, {pipeline_mode = #tpu.pipeline_mode<synchronous>, transform_indices = @transform_2, window_bounds = array<i64: 1, 128>}, {transform_indices = @transform_3, window_bounds = array<i64: 1, 8, 16, 128>}]} {
    %c0 = arith.constant 0 : index
    %c0_0 = arith.constant 0 : index
    %0 = vector.load %arg3[%c0, %c0_0] : memref<1x128xf32, #tpu.memory_space<vmem>>, vector<1x128xf32>
    %1 = vector.shape_cast %0 : vector<1x128xf32> to vector<128xf32>
    %2 = vector.shape_cast %1 : vector<128xf32> to vector<1x1x1x128xf32>
    %c0_1 = arith.constant 0 : index
    %c0_2 = arith.constant 0 : index
    %3 = vector.load %arg4[%c0_1, %c0_2] : memref<1x128xf32, #tpu.memory_space<vmem>>, vector<1x128xf32>
    %4 = vector.shape_cast %3 : vector<1x128xf32> to vector<128xf32>
    %5 = vector.shape_cast %4 : vector<128xf32> to vector<1x1x1x128xf32>
    %c0_3 = arith.constant 0 : index
    %c0_4 = arith.constant 0 : index
    %c0_5 = arith.constant 0 : index
    %c0_6 = arith.constant 0 : index
    %6 = vector.load %arg2[%c0_3, %c0_4, %c0_5, %c0_6] : memref<1x8x16x128xbf16, #tpu.memory_space<vmem>>, vector<1x8x16x128xbf16>
    %7 = arith.extf %6 : vector<1x8x16x128xbf16> to vector<1x8x16x128xf32>
    %8 = vector.broadcast %2 : vector<1x1x1x128xf32> to vector<1x8x16x128xf32>
    %9 = arith.mulf %7, %8 : vector<1x8x16x128xf32>
    %10 = vector.broadcast %5 : vector<1x1x1x128xf32> to vector<1x8x16x128xf32>
    %11 = arith.addf %9, %10 : vector<1x8x16x128xf32>
    %cst = arith.constant 0.000000e+00 : f32
    %12 = vector.broadcast %cst : f32 to vector<1x8x16x128xf32>
    %13 = arith.maximumf %11, %12 : vector<1x8x16x128xf32>
    %c0_7 = arith.constant 0 : index
    %c0_8 = arith.constant 0 : index
    %c0_9 = arith.constant 0 : index
    %c0_10 = arith.constant 0 : index
    %14 = vector.load %arg5[%c0_7, %c0_8, %c0_9, %c0_10] : memref<1x8x16x128xf32, #tpu.memory_space<vmem>>, vector<1x8x16x128xf32>
    tpu.vector_store %arg5[%c0_7, %c0_8, %c0_9, %c0_10], %13 {strides = array<i32>} : memref<1x8x16x128xf32, #tpu.memory_space<vmem>>, vector<1x8x16x128xf32>,
    return
  }
  func.func @transform_0(%arg0: i32, %arg1: i32) -> (i32, i32, i32, i32) {
    %c0_i32 = arith.constant 0 : i32
    %c0_i32_0 = arith.constant 0 : i32
    %c0_i32_1 = arith.constant 0 : i32
    return %arg0, %arg1, %c0_i32, %c0_i32_0 : i32, i32, i32, i32
  }
  func.func @transform_1(%arg0: i32, %arg1: i32) -> (i32, i32) {
    %c0_i32 = arith.constant 0 : i32
    %c0_i32_0 = arith.constant 0 : i32
    %c0_i32_1 = arith.constant 0 : i32
    return %c0_i32, %c0_i32_0 : i32, i32
  }
  func.func @transform_2(%arg0: i32, %arg1: i32) -> (i32, i32) {
    %c0_i32 = arith.constant 0 : i32
    %c0_i32_0 = arith.constant 0 : i32
    %c0_i32_1 = arith.constant 0 : i32
    return %c0_i32, %c0_i32_0 : i32, i32
  }
  func.func @transform_3(%arg0: i32, %arg1: i32) -> (i32, i32, i32, i32) {
    %c0_i32 = arith.constant 0 : i32
    %c0_i32_0 = arith.constant 0 : i32
    %c0_i32_1 = arith.constant 0 : i32
    return %arg0, %arg1, %c0_i32, %c0_i32_0 : i32, i32, i32, i32
  }
}

</mosaic_0001>

<llo_original>
// kernel: cna3x3_forward.3
$region0: #{cna3x3_forward.3}
  #allocation0 [shape = 'u32[]', space=smem, size = 0x4, offset = 0x4, fixed_abs, tag = 'smem constant byte address 0x4 - core index']
  #allocation1 [shape = 'u32[144,128]{1,0:T(1,128)}', space=vmem, size = 0x12000, scoped, tag = 'internal scratch']
  %s0 = inlined_call_operand.vmem [shape: bf16[2,16,16,128], index: 0, kind: input, shape index: {}]
  %s1 = inlined_call_operand.vmem [shape: f32[1,128], index: 1, kind: input, shape index: {}]
  %s2 = inlined_call_operand.vmem [shape: f32[1,128], index: 2, kind: input, shape index: {}]
  %s3 = inlined_call_operand.vmem [shape: f32[2,16,16,128], index: 3, kind: output, shape index: {}]
  %s4 = sld [smem:[#allocation0]]
  $region45: #{cna3x3_forward.3} parent=0
    _
  %s6 = ssub.s32 1, %s4
  %s7 = scalar_select 0, %s6, %s4
  loop: start=0, step=1, limit=6
  $region2: #{cna3x3_forward.3} parent=0 // loop_pre_header
    _
  $region3: #{cna3x3_forward.3} parent=0 // loop_header
    %s9 = sphi 0, %s13
    %p10 = scmp.ge.s32.totalorder %s9, 6
    %s16 = sphi 0, %s28
    %s17 = sphi 0, %s24
    %s18 = sphi 0, %s16
    %s19 = sphi 0, %s17
    %s20 = sphi 0, %s18
    %s21 = sphi 0, %s19
    %s33 = sphi 0, %s35
    %s36 = sphi 0, %s33
    %s37 = sphi 0, %s36
    %s53 = sphi 0, %s37
    %s57 = sphi 0, %s57
    %s59 = sphi 0, %s57
    %s60 = sphi 0, %s59
    %s74 = sphi 0, %s60
    %s78 = sphi 0, %s78
    %s80 = sphi 0, %s78
    %s81 = sphi 0, %s80
    %s95 = sphi 0, %s81
    %s103 = sphi 0, %s105
    %s106 = sphi 0, %s103
    %s107 = sphi 0, %s106
    %s123 = sphi 0, %s107
  $region4: #{cna3x3_forward.3} parent=0 // loop_header_branch
    %12 = sbr.rel (%p10) target = $region8
  $region5: #{cna3x3_forward.3} parent=0 // loop_body
    %s14 = ssub.s32 %s9, 1
    %s15 = ssub.s32 %s9, 2
    %s22 = sadd.s32 1, %s17
    %p23 = scmp.ge.s32.totalorder %s22, 2
    %s24 = scalar_select %p23, 0, %s22
    %s25 = sadd.s32 1, %s16
    %s26 = scalar_select %p23, %s25, %s16
    %p27 = scmp.ge.s32.totalorder %s26, 2
    %s28 = scalar_select %p27, 0, %s26
    %s29 = ssub.s32 %s16, %s28
    %s30 = ssub.s32 %s17, %s24
    %s31 = sor.u32 %s29, %s30
    %p32 = scmp.eq.s32.totalorder %s31, 0
    %s34 = sadd.s32 %s33, 1
    %s35 = scalar_select %p32, %s33, %s34
    %p38 = pneg %p32
    %p39 = scmp.eq.s32.totalorder %s9, 3
    %p40 = por %p38, %p39
    %p41 = scmp.ne.s32.totalorder %s33, %s36
    %p42 = scmp.eq.s32.totalorder %s9, 0
    %p43 = por %p41, %p42
    %p44 = scmp.ne.s32.totalorder %s33, %s36
    %p45 = scmp.eq.s32.totalorder %s14, 3
    %p46 = por %p44, %p45
    %p47 = scmp.ne.s32.totalorder %s36, %s37
    %p48 = scmp.eq.s32.totalorder %s14, 0
    %p49 = por %p47, %p48
    %p50 = scmp.ne.s32.totalorder %s36, %s37
    %p51 = scmp.eq.s32.totalorder %s15, 3
    %p52 = por %p50, %p51
    %p54 = scmp.ne.s32.totalorder %s37, %s53
    %p55 = scmp.eq.s32.totalorder %s15, 0
    %p56 = por %p54, %p55
    %s58 = sadd.s32 %s57, 1
    %p61 = scmp.eq.s32.totalorder %s9, 3
    %p62 = scmp.ne.s32.totalorder %s57, %s59
    %p63 = scmp.eq.s32.totalorder %s9, 0
    %p64 = por %p62, %p63
    %p65 = scmp.ne.s32.totalorder %s57, %s59
    %p66 = scmp.eq.s32.totalorder %s14, 3
    %p67 = por %p65, %p66
    %p68 = scmp.ne.s32.totalorder %s59, %s60
    %p69 = scmp.eq.s32.totalorder %s14, 0
    %p70 = por %p68, %p69
    %p71 = scmp.ne.s32.totalorder %s59, %s60
    %p72 = scmp.eq.s32.totalorder %s15, 3
    %p73 = por %p71, %p72
    %p75 = scmp.ne.s32.totalorder %s60, %s74
    %p76 = scmp.eq.s32.totalorder %s15, 0
    %p77 = por %p75, %p76
    %s79 = sadd.s32 %s78, 1
    %p82 = scmp.eq.s32.totalorder %s9, 3
    %p83 = scmp.ne.s32.totalorder %s78, %s80
    %p84 = scmp.eq.s32.totalorder %s9, 0
    %p85 = por %p83, %p84
    %p86 = scmp.ne.s32.totalorder %s78, %s80
    %p87 = scmp.eq.s32.totalorder %s14, 3
    %p88 = por %p86, %p87
    %p89 = scmp.ne.s32.totalorder %s80, %s81
    %p90 = scmp.eq.s32.totalorder %s14, 0
    %p91 = por %p89, %p90
    %p92 = scmp.ne.s32.totalorder %s80, %s81
    %p93 = scmp.eq.s32.totalorder %s15, 3
    %p94 = por %p92, %p93
    %p96 = scmp.ne.s32.totalorder %s81, %s95
    %p97 = scmp.eq.s32.totalorder %s15, 0
    %p98 = por %p96, %p97
    %s99 = ssub.s32 %s16, %s28
    %s100 = ssub.s32 %s17, %s24
    %s101 = sor.u32 %s99, %s100
    %p102 = scmp.eq.s32.totalorder %s101, 0
    %s104 = sadd.s32 %s103, 1
    %s105 = scalar_select %p102, %s103, %s104
    %p108 = pneg %p102
    %p109 = scmp.eq.s32.totalorder %s9, 3
    %p110 = por %p108, %p109
    %p111 = scmp.ne.s32.totalorder %s103, %s106
    %p112 = scmp.eq.s32.totalorder %s9, 0
    %p113 = por %p111, %p112
    %p114 = scmp.ne.s32.totalorder %s103, %s106
    %p115 = scmp.eq.s32.totalorder %s14, 3
    %p116 = por %p114, %p115
    %p117 = scmp.ne.s32.totalorder %s106, %s107
    %p118 = scmp.eq.s32.totalorder %s14, 0
    %p119 = por %p117, %p118
    %p120 = scmp.ne.s32.totalorder %s106, %s107
    %p121 = scmp.eq.s32.totalorder %s15, 3
    %p122 = por %p120, %p121
    %p124 = scmp.ne.s32.totalorder %s107, %s123
    %p125 = scmp.eq.s32.totalorder %s15, 0
    %p126 = por %p124, %p125
    %p127 = scmp.le.s32.totalorder 1, %s9
    %p128 = scmp.lt.s32.totalorder %s9, 5
    %p129 = pnand %p127, %p128
    %p130 = pneg %p129
    // Predicated region
    $region9: #{cna3x3_forward.3} parent=5 // pred_check
      _
    $region10: #{cna3x3_forward.3} parent=5 // pred_check_branch
      %132 = sbr.rel (%p129) target = $region12
    $region11: #{cna3x3_forward.3} parent=5 // pred_region
      %s133 = ssub.s32 %s9, 1
      // Predicated region
      $region13: #{cna3x3_forward.3} parent=11 // pred_check
        %p134 = pneg %p70
      $region14: #{cna3x3_forward.3} parent=11 // pred_check_branch
        %136 = sbr.rel (%p134) target = $region16
      $region15: #{cna3x3_forward.3} parent=11 // pred_region
        _
      $region16: #{cna3x3_forward.3} parent=11 // pred_fallthru
        _
      // Predicated region
      $region17: #{cna3x3_forward.3} parent=11 // pred_check
        %p137 = pneg %p91
      $region18: #{cna3x3_forward.3} parent=11 // pred_check_branch
        %139 = sbr.rel (%p137) target = $region20
      $region19: #{cna3x3_forward.3} parent=11 // pred_region
        _
      $region20: #{cna3x3_forward.3} parent=11 // pred_fallthru
        _
    $region12: #{cna3x3_forward.3} parent=5 // pred_fallthru
      _
    %p140 = scmp.lt.s32.totalorder %s9, 4
    // Predicated region
    $region21: #{cna3x3_forward.3} parent=5 // pred_check
      %p141 = pneg %p140
    $region22: #{cna3x3_forward.3} parent=5 // pred_check_branch
      %143 = sbr.rel (%p141) target = $region24
    $region23: #{cna3x3_forward.3} parent=5 // pred_region
      // Predicated region
      $region25: #{cna3x3_forward.3} parent=23 // pred_check
        %p144 = pneg %p43
      $region26: #{cna3x3_forward.3} parent=23 // pred_check_branch
        %146 = sbr.rel (%p144) target = $region28
      $region27: #{cna3x3_forward.3} parent=23 // pred_region
        %s147 = smul.u32 8, %s17
        %p148 = scmp.lt.s32.totalorder %s16, 1
        %s149 = scalar_select %p148, %s16, 1
        %p150 = scmp.lt.s32.totalorder %s147, 15
        %s151 = scalar_select %p150, %s147, 15
        %s152 = smul.addr %s151, 2
        %s153 = smul.addr %s149, 32
        %s154 = sadd.s32 %s152, %s153
        %s155 = smul.addr %s154, 4
        %s156 = scalar_lea.vmem %s0, %s155
        %s157 = smul.u32 8, %s17
      $region28: #{cna3x3_forward.3} parent=23 // pred_fallthru
        _
    $region24: #{cna3x3_forward.3} parent=5 // pred_fallthru
      _
    %p158 = scmp.le.s32.totalorder 1, %s9
    %p159 = scmp.lt.s32.totalorder %s9, 5
    %p160 = pnand %p158, %p159
    %p161 = pneg %p160
    // Predicated region
    $region29: #{cna3x3_forward.3} parent=5 // pred_check
      _
    $region30: #{cna3x3_forward.3} parent=5 // pred_check_branch
      %163 = sbr.rel (%p160) target = $region32
    $region31: #{cna3x3_forward.3} parent=5 // pred_region
      %s164 = ssub.s32 %s9, 1
      %s165 = smul.u32 8, %s19
      %p166 = scmp.lt.s32.totalorder %s18, 1
      %s167 = scalar_select %p166, %s18, 1
      %p168 = scmp.lt.s32.totalorder %s165, 15
      %s169 = scalar_select %p168, %s165, 15
      %s170 = smul.addr %s169, 2
      %s171 = smul.addr %s167, 32
      %s172 = sadd.s32 %s170, %s171
      %s173 = smul.addr %s172, 4
      %s174 = scalar_lea.vmem %s0, %s173
      %p175 = pneg %p49
      %p176 = pneg %p46
      %p177 = pneg %p70
      %p178 = pneg %p67
      %p179 = pneg %p91
      %p180 = pneg %p88
      %p181 = pneg %p119
      %p182 = pneg %p116
      %s183 = smul.u32 8, %s19
      %p184 = scmp.lt.s32.totalorder %s18, 1
      %s185 = scalar_select %p184, %s18, 1
      %p186 = scmp.lt.s32.totalorder %s183, 15
      %s187 = scalar_select %p186, %s183, 15
      %s188 = smul.addr %s187, 2
      %s189 = smul.addr %s185, 32
      %s190 = sadd.s32 %s188, %s189
      %s191 = smul.addr %s190, 8
      %s192 = scalar_lea.vmem %s3, %s191
      %s193 = smul.u32 8, %s19
      %p194 = scmp.lt.s32.totalorder %s18, 1
      %s195 = scalar_select %p194, %s18, 1
      %p196 = scmp.lt.s32.totalorder %s193, 15
      %s197 = scalar_select %p196, %s193, 15
      %s198 = smul.addr %s197, 2
      %s199 = smul.addr %s195, 32
      %s200 = sadd.s32 %s198, %s199
      %s201 = smul.addr %s200, 4
      %s202 = scalar_lea.vmem %s0, %s201
      %s203 = smul.u32 8, %s19
      %s204 = smul.u32 8, %s19
      %p205 = scmp.lt.s32.totalorder %s18, 1
      %s206 = scalar_select %p205, %s18, 1
      %p207 = scmp.lt.s32.totalorder %s204, 15
      %s208 = scalar_select %p207, %s204, 15
      %s209 = smul.addr %s208, 2
      %s210 = smul.addr %s206, 32
      %s211 = sadd.s32 %s209, %s210
      %s212 = smul.addr %s211, 8
      %s213 = scalar_lea.vmem %s3, %s212
      %s214 = smul.u32 8, %s19
      %v215 = vld [vmem:[%s1] sm:$0x1]
      %v216 = vld [vmem:[%s2] sm:$0x1]
      %v217 = vld [vmem:[%s202] sm:$0xf]
      %v218 = vld [vmem:[%s202 + $0x4] sm:$0xf]
      %v219 = vld [vmem:[%s202 + $0x8] sm:$0xf]
      %v220 = vld [vmem:[%s202 + $0xc] sm:$0xf]
      %v221 = vld [vmem:[%s202 + $0x10] sm:$0xf]
      %v222 = vld [vmem:[%s202 + $0x14] sm:$0xf]
      %v223 = vld [vmem:[%s202 + $0x18] sm:$0xf]
      %v224 = vld [vmem:[%s202 + $0x1c] sm:$0xf]
      %v225 = vld [vmem:[%s202 + $0x20] sm:$0xf]
      %v226 = vld [vmem:[%s202 + $0x24] sm:$0xf]
      %v227 = vld [vmem:[%s202 + $0x28] sm:$0xf]
      %v228 = vld [vmem:[%s202 + $0x2c] sm:$0xf]
      %v229 = vld [vmem:[%s202 + $0x30] sm:$0xf]
      %v230 = vld [vmem:[%s202 + $0x34] sm:$0xf]
      %v231 = vld [vmem:[%s202 + $0x38] sm:$0xf]
      %v232 = vld [vmem:[%s202 + $0x3c] sm:$0xf]
      %v233 = vunpack.c.l.bf16 %v217
      %v234 = vunpack.c.l.bf16 %v218
      %v235 = vunpack.c.l.bf16 %v219
      %v236 = vunpack.c.l.bf16 %v220
      %v237 = vunpack.c.l.bf16 %v221
      %v238 = vunpack.c.l.bf16 %v222
      %v239 = vunpack.c.l.bf16 %v223
      %v240 = vunpack.c.l.bf16 %v224
      %v241 = vunpack.c.l.bf16 %v225
      %v242 = vunpack.c.l.bf16 %v226
      %v243 = vunpack.c.l.bf16 %v227
      %v244 = vunpack.c.l.bf16 %v228
      %v245 = vunpack.c.l.bf16 %v229
      %v246 = vunpack.c.l.bf16 %v230
      %v247 = vunpack.c.l.bf16 %v231
      %v248 = vunpack.c.l.bf16 %v232
      %v250 = vlaneseq
      %v251 = vshrl.u32 %v250, 7
      %v252 = vsub.s32 0, %v251
      %v253 = vrot.slane %v215, %v252
      %v255 = vmul.f32 %v233, %v253
      %v256 = vmul.f32 %v234, %v253
      %v257 = vmul.f32 %v235, %v253
      %v258 = vmul.f32 %v236, %v253
      %v259 = vmul.f32 %v237, %v253
      %v260 = vmul.f32 %v238, %v253
      %v261 = vmul.f32 %v239, %v253
      %v262 = vmul.f32 %v240, %v253
      %v263 = vmul.f32 %v241, %v253
      %v264 = vmul.f32 %v242, %v253
      %v265 = vmul.f32 %v243, %v253
      %v266 = vmul.f32 %v244, %v253
      %v267 = vmul.f32 %v245, %v253
      %v268 = vmul.f32 %v246, %v253
      %v269 = vmul.f32 %v247, %v253
      %v270 = vmul.f32 %v248, %v253
      %v272 = vlaneseq
      %v273 = vshrl.u32 %v272, 7
      %v274 = vsub.s32 0, %v273
      %v275 = vrot.slane %v216, %v274
      %v277 = vadd.f32 %v255, %v275
      %v278 = vadd.f32 %v256, %v275
      %v279 = vadd.f32 %v257, %v275
      %v280 = vadd.f32 %v258, %v275
      %v281 = vadd.f32 %v259, %v275
      %v282 = vadd.f32 %v260, %v275
      %v283 = vadd.f32 %v261, %v275
      %v284 = vadd.f32 %v262, %v275
      %v285 = vadd.f32 %v263, %v275
      %v286 = vadd.f32 %v264, %v275
      %v287 = vadd.f32 %v265, %v275
      %v288 = vadd.f32 %v266, %v275
      %v289 = vadd.f32 %v267, %v275
      %v290 = vadd.f32 %v268, %v275
      %v291 = vadd.f32 %v269, %v275
      %v292 = vadd.f32 %v270, %v275
      %v293 = vmax.f32 %v277, 0.0
      %v294 = vmax.f32 %v278, 0.0
      %v295 = vmax.f32 %v279, 0.0
      %v296 = vmax.f32 %v280, 0.0
      %v297 = vmax.f32 %v281, 0.0
      %v298 = vmax.f32 %v282, 0.0
      %v299 = vmax.f32 %v283, 0.0
      %v300 = vmax.f32 %v284, 0.0
      %v301 = vmax.f32 %v285, 0.0
      %v302 = vmax.f32 %v286, 0.0
      %v303 = vmax.f32 %v287, 0.0
      %v304 = vmax.f32 %v288, 0.0
      %v305 = vmax.f32 %v289, 0.0
      %v306 = vmax.f32 %v290, 0.0
      %v307 = vmax.f32 %v291, 0.0
      %v308 = vmax.f32 %v292, 0.0
      %309 = vst [vmem:[%s213] sm:$0xff] %v293
      %310 = vst [vmem:[%s213 + $0x8] sm:$0xff] %v294
      %311 = vst [vmem:[%s213 + $0x10] sm:$0xff] %v295
      %312 = vst [vmem:[%s213 + $0x18] sm:$0xff] %v296
      %313 = vst [vmem:[%s213 + $0x20] sm:$0xff] %v297
      %314 = vst [vmem:[%s213 + $0x28] sm:$0xff] %v298
      %315 = vst [vmem:[%s213 + $0x30] sm:$0xff] %v299
      %316 = vst [vmem:[%s213 + $0x38] sm:$0xff] %v300
      %317 = vst [vmem:[%s213 + $0x40] sm:$0xff] %v301
      %318 = vst [vmem:[%s213 + $0x48] sm:$0xff] %v302
      %319 = vst [vmem:[%s213 + $0x50] sm:$0xff] %v303
      %320 = vst [vmem:[%s213 + $0x58] sm:$0xff] %v304
      %321 = vst [vmem:[%s213 + $0x60] sm:$0xff] %v305
      %322 = vst [vmem:[%s213 + $0x68] sm:$0xff] %v306
      %323 = vst [vmem:[%s213 + $0x70] sm:$0xff] %v307
      %324 = vst [vmem:[%s213 + $0x78] sm:$0xff] %v308
      %s325 = smul.u32 8, %s19
      %p326 = scmp.lt.s32.totalorder %s18, 1
      %s327 = scalar_select %p326, %s18, 1
      %p328 = scmp.lt.s32.totalorder %s325, 15
      %s329 = scalar_select %p328, %s325, 15
      %s330 = smul.addr %s329, 2
      %s331 = smul.addr %s327, 32
      %s332 = sadd.s32 %s330, %s331
      %s333 = smul.addr %s332, 8
      %s334 = scalar_lea.vmem %s3, %s333
      // Predicated region
      $region33: #{cna3x3_forward.3} parent=31 // pred_check
        %p335 = pneg %p116
      $region34: #{cna3x3_forward.3} parent=31 // pred_check_branch
        %337 = sbr.rel (%p335) target = $region36
      $region35: #{cna3x3_forward.3} parent=31 // pred_region
        %s338 = smul.u32 8, %s19
      $region36: #{cna3x3_forward.3} parent=31 // pred_fallthru
        _
    $region32: #{cna3x3_forward.3} parent=5 // pred_fallthru
      _
    %p339 = scmp.le.s32.totalorder 2, %s9
    // Predicated region
    $region37: #{cna3x3_forward.3} parent=5 // pred_check
      %p340 = pneg %p339
    $region38: #{cna3x3_forward.3} parent=5 // pred_check_branch
      %342 = sbr.rel (%p340) target = $region40
    $region39: #{cna3x3_forward.3} parent=5 // pred_region
      %s343 = ssub.s32 %s9, 2
      // Predicated region
      $region41: #{cna3x3_forward.3} parent=39 // pred_check
        %p344 = pneg %p122
      $region42: #{cna3x3_forward.3} parent=39 // pred_check_branch
        %346 = sbr.rel (%p344) target = $region44
      $region43: #{cna3x3_forward.3} parent=39 // pred_region
        %s347 = smul.u32 8, %s21
        %p348 = scmp.lt.s32.totalorder %s20, 1
        %s349 = scalar_select %p348, %s20, 1
        %p350 = scmp.lt.s32.totalorder %s347, 15
        %s351 = scalar_select %p350, %s347, 15
        %s352 = smul.addr %s351, 2
        %s353 = smul.addr %s349, 32
        %s354 = sadd.s32 %s352, %s353
        %s355 = smul.addr %s354, 8
        %s356 = scalar_lea.vmem %s3, %s355
      $region44: #{cna3x3_forward.3} parent=39 // pred_fallthru
        _
    $region40: #{cna3x3_forward.3} parent=5 // pred_fallthru
      _
  $region6: #{cna3x3_forward.3} parent=0 // loop_footer
    %s13 = sadd.s32 1, %s9
  $region7: #{cna3x3_forward.3} parent=0 // loop_footer_branch
    %8 = sbr.rel target = $region3
  $region8: #{cna3x3_forward.3} parent=0 // loop_exit
    _

// kernel: cna3x3_forward.2
$region0: #{cna3x3_forward.2}
  #allocation0 [shape = 'u32[]', space=smem, size = 0x4, offset = 0x4, fixed_abs, tag = 'smem constant byte address 0x4 - core index']
  #allocation1 [shape = 'u32[144,128]{1,0:T(1,128)}', space=vmem, size = 0x12000, scoped, tag = 'internal scratch']
  #allocation2 [shape = 'bf16[18,16,384]{2,1,0:T(8,128)(2,1)}', space=vmem, size = 0x36000, scoped, tag = 'scratch operand']
  %s0 = inlined_call_operand.vmem [shape: bf16[2,16,16,4], index: 0, kind: input, shape index: {}]
  %s1 = inlined_call_operand.vmem [shape: bf16[3,384,128], index: 1, kind: input, shape index: {}]
  %s2 = inlined_call_operand.vmem [shape: bf16[2,16,16,128], index: 2, kind: output, shape index: {0}]
  %s3 = inlined_call_operand.vmem [shape: f32[2,2,128], index: 3, kind: output, shape index: {1}]
  %4 = xla_tuple %s2, %s3
  %s5 = sld [smem:[#allocation0]]
  $region53: #{cna3x3_forward.2} parent=0
    _
  %s7 = ssub.s32 1, %s5
  %s8 = scalar_select 0, %s7, %s5
  loop: start=0, step=1, limit=6
  $region2: #{cna3x3_forward.2} parent=0 // loop_pre_header
    _
  $region3: #{cna3x3_forward.2} parent=0 // loop_header
    %s10 = sphi 0, %s14
    %p11 = scmp.ge.s32.totalorder %s10, 6
    %s17 = sphi 0, %s29
    %s18 = sphi 0, %s25
    %s19 = sphi 0, %s17
    %s20 = sphi 0, %s18
    %s21 = sphi 0, %s19
    %s22 = sphi 0, %s20
    %s32 = sphi 0, %s34
    %s35 = sphi 0, %s32
    %s36 = sphi 0, %s35
    %s52 = sphi 0, %s36
    %s56 = sphi 0, %s56
    %s58 = sphi 0, %s56
    %s59 = sphi 0, %s58
    %s73 = sphi 0, %s59
    %s81 = sphi 0, %s83
    %s84 = sphi 0, %s81
    %s85 = sphi 0, %s84
    %s101 = sphi 0, %s85
    %s107 = sphi 0, %s109
    %s110 = sphi 0, %s107
    %s111 = sphi 0, %s110
    %s127 = sphi 0, %s111
  $region4: #{cna3x3_forward.2} parent=0 // loop_header_branch
    %13 = sbr.rel (%p11) target = $region8
  $region5: #{cna3x3_forward.2} parent=0 // loop_body
    %s15 = ssub.s32 %s10, 1
    %s16 = ssub.s32 %s10, 2
    %s23 = sadd.s32 1, %s18
    %p24 = scmp.ge.s32.totalorder %s23, 2
    %s25 = scalar_select %p24, 0, %s23
    %s26 = sadd.s32 1, %s17
    %s27 = scalar_select %p24, %s26, %s17
    %p28 = scmp.ge.s32.totalorder %s27, 2
    %s29 = scalar_select %p28, 0, %s27
    %s30 = ssub.s32 %s17, %s29
    %p31 = scmp.eq.s32.totalorder %s30, 0
    %s33 = sadd.s32 %s32, 1
    %s34 = scalar_select %p31, %s32, %s33
    %p37 = pneg %p31
    %p38 = scmp.eq.s32.totalorder %s10, 3
    %p39 = por %p37, %p38
    %p40 = scmp.ne.s32.totalorder %s32, %s35
    %p41 = scmp.eq.s32.totalorder %s10, 0
    %p42 = por %p40, %p41
    %p43 = scmp.ne.s32.totalorder %s32, %s35
    %p44 = scmp.eq.s32.totalorder %s15, 3
    %p45 = por %p43, %p44
    %p46 = scmp.ne.s32.totalorder %s35, %s36
    %p47 = scmp.eq.s32.totalorder %s15, 0
    %p48 = por %p46, %p47
    %p49 = scmp.ne.s32.totalorder %s35, %s36
    %p50 = scmp.eq.s32.totalorder %s16, 3
    %p51 = por %p49, %p50
    %p53 = scmp.ne.s32.totalorder %s36, %s52
    %p54 = scmp.eq.s32.totalorder %s16, 0
    %p55 = por %p53, %p54
    %s57 = sadd.s32 %s56, 1
    %p60 = scmp.eq.s32.totalorder %s10, 3
    %p61 = scmp.ne.s32.totalorder %s56, %s58
    %p62 = scmp.eq.s32.totalorder %s10, 0
    %p63 = por %p61, %p62
    %p64 = scmp.ne.s32.totalorder %s56, %s58
    %p65 = scmp.eq.s32.totalorder %s15, 3
    %p66 = por %p64, %p65
    %p67 = scmp.ne.s32.totalorder %s58, %s59
    %p68 = scmp.eq.s32.totalorder %s15, 0
    %p69 = por %p67, %p68
    %p70 = scmp.ne.s32.totalorder %s58, %s59
    %p71 = scmp.eq.s32.totalorder %s16, 3
    %p72 = por %p70, %p71
    %p74 = scmp.ne.s32.totalorder %s59, %s73
    %p75 = scmp.eq.s32.totalorder %s16, 0
    %p76 = por %p74, %p75
    %s77 = ssub.s32 %s17, %s29
    %s78 = ssub.s32 %s18, %s25
    %s79 = sor.u32 %s77, %s78
    %p80 = scmp.eq.s32.totalorder %s79, 0
    %s82 = sadd.s32 %s81, 1
    %s83 = scalar_select %p80, %s81, %s82
    %p86 = pneg %p80
    %p87 = scmp.eq.s32.totalorder %s10, 3
    %p88 = por %p86, %p87
    %p89 = scmp.ne.s32.totalorder %s81, %s84
    %p90 = scmp.eq.s32.totalorder %s10, 0
    %p91 = por %p89, %p90
    %p92 = scmp.ne.s32.totalorder %s81, %s84
    %p93 = scmp.eq.s32.totalorder %s15, 3
    %p94 = por %p92, %p93
    %p95 = scmp.ne.s32.totalorder %s84, %s85
    %p96 = scmp.eq.s32.totalorder %s15, 0
    %p97 = por %p95, %p96
    %p98 = scmp.ne.s32.totalorder %s84, %s85
    %p99 = scmp.eq.s32.totalorder %s16, 3
    %p100 = por %p98, %p99
    %p102 = scmp.ne.s32.totalorder %s85, %s101
    %p103 = scmp.eq.s32.totalorder %s16, 0
    %p104 = por %p102, %p103
    %s105 = ssub.s32 %s17, %s29
    %p106 = scmp.eq.s32.totalorder %s105, 0
    %s108 = sadd.s32 %s107, 1
    %s109 = scalar_select %p106, %s107, %s108
    %p112 = pneg %p106
    %p113 = scmp.eq.s32.totalorder %s10, 3
    %p114 = por %p112, %p113
    %p115 = scmp.ne.s32.totalorder %s107, %s110
    %p116 = scmp.eq.s32.totalorder %s10, 0
    %p117 = por %p115, %p116
    %p118 = scmp.ne.s32.totalorder %s107, %s110
    %p119 = scmp.eq.s32.totalorder %s15, 3
    %p120 = por %p118, %p119
    %p121 = scmp.ne.s32.totalorder %s110, %s111
    %p122 = scmp.eq.s32.totalorder %s15, 0
    %p123 = por %p121, %p122
    %p124 = scmp.ne.s32.totalorder %s110, %s111
    %p125 = scmp.eq.s32.totalorder %s16, 3
    %p126 = por %p124, %p125
    %p128 = scmp.ne.s32.totalorder %s111, %s127
    %p129 = scmp.eq.s32.totalorder %s16, 0
    %p130 = por %p128, %p129
    %p131 = scmp.le.s32.totalorder 1, %s10
    %p132 = scmp.lt.s32.totalorder %s10, 5
    %p133 = pnand %p131, %p132
    %p134 = pneg %p133
    // Predicated region
    $region9: #{cna3x3_forward.2} parent=5 // pred_check
      _
    $region10: #{cna3x3_forward.2} parent=5 // pred_check_branch
      %136 = sbr.rel (%p133) target = $region12
    $region11: #{cna3x3_forward.2} parent=5 // pred_region
      %s137 = ssub.s32 %s10, 1
      // Predicated region
      $region13: #{cna3x3_forward.2} parent=11 // pred_check
        %p138 = pneg %p69
      $region14: #{cna3x3_forward.2} parent=11 // pred_check_branch
        %140 = sbr.rel (%p138) target = $region16
      $region15: #{cna3x3_forward.2} parent=11 // pred_region
        _
      $region16: #{cna3x3_forward.2} parent=11 // pred_fallthru
        _
    $region12: #{cna3x3_forward.2} parent=5 // pred_fallthru
      _
    %p141 = scmp.lt.s32.totalorder %s10, 4
    // Predicated region
    $region17: #{cna3x3_forward.2} parent=5 // pred_check
      %p142 = pneg %p141
    $region18: #{cna3x3_forward.2} parent=5 // pred_check_branch
      %144 = sbr.rel (%p142) target = $region20
    $region19: #{cna3x3_forward.2} parent=5 // pred_region
      // Predicated region
      $region21: #{cna3x3_forward.2} parent=19 // pred_check
        %p145 = pneg %p42
      $region22: #{cna3x3_forward.2} parent=19 // pred_check_branch
        %147 = sbr.rel (%p145) target = $region24
      $region23: #{cna3x3_forward.2} parent=19 // pred_region
        %p148 = scmp.lt.s32.totalorder %s17, 1
        %s149 = scalar_select %p148, %s17, 1
        %s150 = smul.addr %s149, 32
        %s151 = smul.addr %s150, 4
        %s152 = scalar_lea.vmem %s0, %s151
      $region24: #{cna3x3_forward.2} parent=19 // pred_fallthru
        _
    $region20: #{cna3x3_forward.2} parent=5 // pred_fallthru
      _
    %p153 = scmp.le.s32.totalorder 1, %s10
    %p154 = scmp.lt.s32.totalorder %s10, 5
    %p155 = pnand %p153, %p154
    %p156 = pneg %p155
    // Predicated region
    $region25: #{cna3x3_forward.2} parent=5 // pred_check
      _
    $region26: #{cna3x3_forward.2} parent=5 // pred_check_branch
      %158 = sbr.rel (%p155) target = $region28
    $region27: #{cna3x3_forward.2} parent=5 // pred_region
      %s159 = ssub.s32 %s10, 1
      %p160 = scmp.lt.s32.totalorder %s19, 1
      %s161 = scalar_select %p160, %s19, 1
      %s162 = smul.addr %s161, 32
      %s163 = smul.addr %s162, 4
      %s164 = scalar_lea.vmem %s0, %s163
      %p165 = pneg %p48
      %p166 = pneg %p45
      %p167 = pneg %p69
      %p168 = pneg %p66
      %p169 = pneg %p97
      %p170 = pneg %p94
      %s171 = smul.u32 8, %s20
      %p172 = scmp.lt.s32.totalorder %s19, 1
      %s173 = scalar_select %p172, %s19, 1
      %p174 = scmp.lt.s32.totalorder %s171, 15
      %s175 = scalar_select %p174, %s171, 15
      %s176 = smul.addr %s175, 2
      %s177 = smul.addr %s173, 32
      %s178 = sadd.s32 %s176, %s177
      %s179 = smul.addr %s178, 4
      %s180 = scalar_lea.vmem %s2, %s179
      %p181 = pneg %p123
      %p182 = pneg %p120
      %p183 = scmp.lt.s32.totalorder %s19, 1
      %s184 = scalar_select %p183, %s19, 1
      %s185 = smul.addr %s184, 2
      %s186 = scalar_lea.vmem %s3, %s185
      %p187 = scmp.lt.s32.totalorder %s19, 1
      %s188 = scalar_select %p187, %s19, 1
      %s189 = smul.addr %s188, 32
      %s190 = smul.addr %s189, 4
      %s191 = scalar_lea.vmem %s0, %s190
      %s192 = smul.u32 8, %s20
      %p193 = scmp.lt.s32.totalorder %s19, 1
      %s194 = scalar_select %p193, %s19, 1
      %p195 = scmp.lt.s32.totalorder %s192, 15
      %s196 = scalar_select %p195, %s192, 15
      %s197 = smul.addr %s196, 2
      %s198 = smul.addr %s194, 32
      %s199 = sadd.s32 %s197, %s198
      %s200 = smul.addr %s199, 4
      %s201 = scalar_lea.vmem %s2, %s200
      %s202 = smul.u32 8, %s20
      %p203 = scmp.lt.s32.totalorder %s19, 1
      %s204 = scalar_select %p203, %s19, 1
      %s205 = smul.addr %s204, 2
      %s206 = scalar_lea.vmem %s3, %s205
      %p208 = scmp.eq.s32.totalorder %s20, 0
      // Predicated region
      $region29: #{cna3x3_forward.2} parent=27 // pred_check
        %p209 = pneg %p208
      $region30: #{cna3x3_forward.2} parent=27 // pred_check_branch
        %211 = sbr.rel (%p209) target = $region32
      $region31: #{cna3x3_forward.2} parent=27 // pred_region
        %212 = vst [vmem:[%s206] sm:$0x3] 0.0
        %213 = vst [vmem:[#allocation2] sm:$0xff] 0
        %214 = vst [vmem:[#allocation2 + $0x8] sm:$0xf] 0
        %215 = vst [vmem:[#allocation2 + $0xc] sm:$0xff] 0
        %216 = vst [vmem:[#allocation2 + $0x14] sm:$0xf] 0
        %217 = vst [vmem:[#allocation2 + $0x18] sm:$0xff] 0
        %218 = vst [vmem:[#allocation2 + $0x20] sm:$0xf] 0
        %219 = vst [vmem:[#allocation2 + $0x24] sm:$0xff] 0
        %220 = vst [vmem:[#allocation2 + $0x2c] sm:$0xf] 0
        %221 = vst [vmem:[#allocation2 + $0x30] sm:$0xff] 0
        %222 = vst [vmem:[#allocation2 + $0x38] sm:$0xf] 0
        %223 = vst [vmem:[#allocation2 + $0x3c] sm:$0xff] 0
        %224 = vst [vmem:[#allocation2 + $0x44] sm:$0xf] 0
        %225 = vst [vmem:[#allocation2 + $0x48] sm:$0xff] 0
        %226 = vst [vmem:[#allocation2 + $0x50] sm:$0xf] 0
        %227 = vst [vmem:[#allocation2 + $0x54] sm:$0xff] 0
        %228 = vst [vmem:[#allocation2 + $0x5c] sm:$0xf] 0
        %229 = vst [vmem:[#allocation2 + $0x60] sm:$0xff] 0
        %230 = vst [vmem:[#allocation2 + $0x68] sm:$0xf] 0
        %231 = vst [vmem:[#allocation2 + $0x6c] sm:$0xff] 0
        %232 = vst [vmem:[#allocation2 + $0x74] sm:$0xf] 0
        %233 = vst [vmem:[#allocation2 + $0x78] sm:$0xff] 0
        %234 = vst [vmem:[#allocation2 + $0x80] sm:$0xf] 0
        %235 = vst [vmem:[#allocation2 + $0x84] sm:$0xff] 0
        %236 = vst [vmem:[#allocation2 + $0x8c] sm:$0xf] 0
        %237 = vst [vmem:[#allocation2 + $0x90] sm:$0xff] 0
        %238 = vst [vmem:[#allocation2 + $0x98] sm:$0xf] 0
        %239 = vst [vmem:[#allocation2 + $0x9c] sm:$0xff] 0
        %240 = vst [vmem:[#allocation2 + $0xa4] sm:$0xf] 0
        %241 = vst [vmem:[#allocation2 + $0xa8] sm:$0xff] 0
        %242 = vst [vmem:[#allocation2 + $0xb0] sm:$0xf] 0
        %243 = vst [vmem:[#allocation2 + $0xb4] sm:$0xff] 0
        %244 = vst [vmem:[#allocation2 + $0xbc] sm:$0xf] 0
        %245 = vst [vmem:[#allocation2 + $0xc0] sm:$0xff] 0
        %246 = vst [vmem:[#allocation2 + $0xc8] sm:$0xf] 0
        %247 = vst [vmem:[#allocation2 + $0xcc] sm:$0xff] 0
        %248 = vst [vmem:[#allocation2 + $0xd4] sm:$0xf] 0
        %249 = vst [vmem:[#allocation2 + $0xd8] sm:$0xff] 0
        %250 = vst [vmem:[#allocation2 + $0xe0] sm:$0xf] 0
        %251 = vst [vmem:[#allocation2 + $0xe4] sm:$0xff] 0
        %252 = vst [vmem:[#allocation2 + $0xec] sm:$0xf] 0
        %253 = vst [vmem:[#allocation2 + $0xf0] sm:$0xff] 0
        %254 = vst [vmem:[#allocation2 + $0xf8] sm:$0xf] 0
        %255 = vst [vmem:[#allocation2 + $0xfc] sm:$0xff] 0
        %256 = vst [vmem:[#allocation2 + $0x104] sm:$0xf] 0
        %257 = vst [vmem:[#allocation2 + $0x108] sm:$0xff] 0
        %258 = vst [vmem:[#allocation2 + $0x110] sm:$0xf] 0
        %259 = vst [vmem:[#allocation2 + $0x114] sm:$0xff] 0
        %260 = vst [vmem:[#allocation2 + $0x11c] sm:$0xf] 0
        %261 = vst [vmem:[#allocation2 + $0x120] sm:$0xff] 0
        %262 = vst [vmem:[#allocation2 + $0x128] sm:$0xf] 0
        %263 = vst [vmem:[#allocation2 + $0x12c] sm:$0xff] 0
        %264 = vst [vmem:[#allocation2 + $0x134] sm:$0xf] 0
        %265 = vst [vmem:[#allocation2 + $0x138] sm:$0xff] 0
        %266 = vst [vmem:[#allocation2 + $0x140] sm:$0xf] 0
        %267 = vst [vmem:[#allocation2 + $0x144] sm:$0xff] 0
        %268 = vst [vmem:[#allocation2 + $0x14c] sm:$0xf] 0
        %269 = vst [vmem:[#allocation2 + $0x150] sm:$0xff] 0
        %270 = vst [vmem:[#allocation2 + $0x158] sm:$0xf] 0
        %271 = vst [vmem:[#allocation2 + $0x15c] sm:$0xff] 0
        %272 = vst [vmem:[#allocation2 + $0x164] sm:$0xf] 0
        %273 = vst [vmem:[#allocation2 + $0x168] sm:$0xff] 0
        %274 = vst [vmem:[#allocation2 + $0x170] sm:$0xf] 0
        %275 = vst [vmem:[#allocation2 + $0x174] sm:$0xff] 0
        %276 = vst [vmem:[#allocation2 + $0x17c] sm:$0xf] 0
        %277 = vst [vmem:[#allocation2 + $0x180] sm:$0xff] 0
        %278 = vst [vmem:[#allocation2 + $0x188] sm:$0xf] 0
        %279 = vst [vmem:[#allocation2 + $0x18c] sm:$0xff] 0
        %280 = vst [vmem:[#allocation2 + $0x194] sm:$0xf] 0
        %281 = vst [vmem:[#allocation2 + $0x198] sm:$0xff] 0
        %282 = vst [vmem:[#allocation2 + $0x1a0] sm:$0xf] 0
        %283 = vst [vmem:[#allocation2 + $0x1a4] sm:$0xff] 0
        %284 = vst [vmem:[#allocation2 + $0x1ac] sm:$0xf] 0
        %v285 = vld [vmem:[%s191] sm:$0xf]
        %v286 = vld [vmem:[%s191 + $0x4] sm:$0xf]
        %v287 = vld [vmem:[%s191 + $0x8] sm:$0xf]
        %v288 = vld [vmem:[%s191 + $0xc] sm:$0xf]
        %v289 = vld [vmem:[%s191 + $0x10] sm:$0xf]
        %v290 = vld [vmem:[%s191 + $0x14] sm:$0xf]
        %v291 = vld [vmem:[%s191 + $0x18] sm:$0xf]
        %v292 = vld [vmem:[%s191 + $0x1c] sm:$0xf]
        %v293 = vld [vmem:[%s191 + $0x20] sm:$0xf]
        %v294 = vld [vmem:[%s191 + $0x24] sm:$0xf]
        %v295 = vld [vmem:[%s191 + $0x28] sm:$0xf]
        %v296 = vld [vmem:[%s191 + $0x2c] sm:$0xf]
        %v297 = vld [vmem:[%s191 + $0x30] sm:$0xf]
        %v298 = vld [vmem:[%s191 + $0x34] sm:$0xf]
        %v299 = vld [vmem:[%s191 + $0x38] sm:$0xf]
        %v300 = vld [vmem:[%s191 + $0x3c] sm:$0xf]
        %v301 = vld [vmem:[%s191 + $0x40] sm:$0xf]
        %v302 = vld [vmem:[%s191 + $0x44] sm:$0xf]
        %v303 = vld [vmem:[%s191 + $0x48] sm:$0xf]
        %v304 = vld [vmem:[%s191 + $0x4c] sm:$0xf]
        %v305 = vld [vmem:[%s191 + $0x50] sm:$0xf]
        %v306 = vld [vmem:[%s191 + $0x54] sm:$0xf]
        %v307 = vld [vmem:[%s191 + $0x58] sm:$0xf]
        %v308 = vld [vmem:[%s191 + $0x5c] sm:$0xf]
        %v309 = vld [vmem:[%s191 + $0x60] sm:$0xf]
        %v310 = vld [vmem:[%s191 + $0x64] sm:$0xf]
        %v311 = vld [vmem:[%s191 + $0x68] sm:$0xf]
        %v312 = vld [vmem:[%s191 + $0x6c] sm:$0xf]
        %v313 = vld [vmem:[%s191 + $0x70] sm:$0xf]
        %v314 = vld [vmem:[%s191 + $0x74] sm:$0xf]
        %v315 = vld [vmem:[%s191 + $0x78] sm:$0xf]
        %v316 = vld [vmem:[%s191 + $0x7c] sm:$0xf]
        %vm317 = vsmask.f32 256
        %vm318 = vsmask.f32 4368
        %vm319 = vmor %vm317, %vm318
        %v321 = vshrl.u32 %v285, 16
        %v323 = vrot.slane %v321, 7
        %v324 = vshll.u32 %v285, 16
        %v326 = vor.u32 %v323, %v324
        %v327 = vrot.slane %v323, 4
        %v329 = vshrl.u32 %v286, 16
        %v331 = vrot.slane %v329, 7
        %v332 = vshll.u32 %v286, 16
        %v334 = vor.u32 %v331, %v332
        %v335 = vsel %vm319, %v327, %v334
        %v337 = vshrl.u32 %v287, 16
        %v339 = vrot.slane %v337, 7
        %v340 = vshll.u32 %v287, 16
        %v342 = vor.u32 %v339, %v340
        %v343 = vrot.slane %v339, 4
        %v345 = vshrl.u32 %v288, 16
        %v347 = vrot.slane %v345, 7
        %v348 = vshll.u32 %v288, 16
        %v350 = vor.u32 %v347, %v348
        %v351 = vsel %vm319, %v343, %v350
        %v353 = vshrl.u32 %v289, 16
        %v355 = vrot.slane %v353, 7
        %v356 = vshll.u32 %v289, 16
        %v358 = vor.u32 %v355, %v356
        %v359 = vrot.slane %v355, 4
        %v361 = vshrl.u32 %v290, 16
        %v363 = vrot.slane %v361, 7
        %v364 = vshll.u32 %v290, 16
        %v366 = vor.u32 %v363, %v364
        %v367 = vsel %vm319, %v359, %v366
        %v369 = vshrl.u32 %v291, 16
        %v371 = vrot.slane %v369, 7
        %v372 = vshll.u32 %v291, 16
        %v374 = vor.u32 %v371, %v372
        %v375 = vrot.slane %v371, 4
        %v377 = vshrl.u32 %v292, 16
        %v379 = vrot.slane %v377, 7
        %v380 = vshll.u32 %v292, 16
        %v382 = vor.u32 %v379, %v380
        %v383 = vsel %vm319, %v375, %v382
        %v385 = vshrl.u32 %v293, 16
        %v387 = vrot.slane %v385, 7
        %v388 = vshll.u32 %v293, 16
        %v390 = vor.u32 %v387, %v388
        %v391 = vrot.slane %v387, 4
        %v393 = vshrl.u32 %v294, 16
        %v395 = vrot.slane %v393, 7
        %v396 = vshll.u32 %v294, 16
        %v398 = vor.u32 %v395, %v396
        %v399 = vsel %vm319, %v391, %v398
        %v401 = vshrl.u32 %v295, 16
        %v403 = vrot.slane %v401, 7
        %v404 = vshll.u32 %v295, 16
        %v406 = vor.u32 %v403, %v404
        %v407 = vrot.slane %v403, 4
        %v409 = vshrl.u32 %v296, 16
        %v411 = vrot.slane %v409, 7
        %v412 = vshll.u32 %v296, 16
        %v414 = vor.u32 %v411, %v412
        %v415 = vsel %vm319, %v407, %v414
        %v417 = vshrl.u32 %v297, 16
        %v419 = vrot.slane %v417, 7
        %v420 = vshll.u32 %v297, 16
        %v422 = vor.u32 %v419, %v420
        %v423 = vrot.slane %v419, 4
        %v425 = vshrl.u32 %v298, 16
        %v427 = vrot.slane %v425, 7
        %v428 = vshll.u32 %v298, 16
        %v430 = vor.u32 %v427, %v428
        %v431 = vsel %vm319, %v423, %v430
        %v433 = vshrl.u32 %v299, 16
        %v435 = vrot.slane %v433, 7
        %v436 = vshll.u32 %v299, 16
        %v438 = vor.u32 %v435, %v436
        %v439 = vrot.slane %v435, 4
        %v441 = vshrl.u32 %v300, 16
        %v443 = vrot.slane %v441, 7
        %v444 = vshll.u32 %v300, 16
        %v446 = vor.u32 %v443, %v444
        %v447 = vsel %vm319, %v439, %v446
        %v449 = vshrl.u32 %v301, 16
        %v451 = vrot.slane %v449, 7
        %v452 = vshll.u32 %v301, 16
        %v454 = vor.u32 %v451, %v452
        %v455 = vrot.slane %v451, 4
        %v457 = vshrl.u32 %v302, 16
        %v459 = vrot.slane %v457, 7
        %v460 = vshll.u32 %v302, 16
        %v462 = vor.u32 %v459, %v460
        %v463 = vsel %vm319, %v455, %v462
        %v465 = vshrl.u32 %v303, 16
        %v467 = vrot.slane %v465, 7
        %v468 = vshll.u32 %v303, 16
        %v470 = vor.u32 %v467, %v468
        %v471 = vrot.slane %v467, 4
        %v473 = vshrl.u32 %v304, 16
        %v475 = vrot.slane %v473, 7
        %v476 = vshll.u32 %v304, 16
        %v478 = vor.u32 %v475, %v476
        %v479 = vsel %vm319, %v471, %v478
        %v481 = vshrl.u32 %v305, 16
        %v483 = vrot.slane %v481, 7
        %v484 = vshll.u32 %v305, 16
        %v486 = vor.u32 %v483, %v484
        %v487 = vrot.slane %v483, 4
        %v489 = vshrl.u32 %v306, 16
        %v491 = vrot.slane %v489, 7
        %v492 = vshll.u32 %v306, 16
        %v494 = vor.u32 %v491, %v492
        %v495 = vsel %vm319, %v487, %v494
        %v497 = vshrl.u32 %v307, 16
        %v499 = vrot.slane %v497, 7
        %v500 = vshll.u32 %v307, 16
        %v502 = vor.u32 %v499, %v500
        %v503 = vrot.slane %v499, 4
        %v505 = vshrl.u32 %v308, 16
        %v507 = vrot.slane %v505, 7
        %v508 = vshll.u32 %v308, 16
        %v510 = vor.u32 %v507, %v508
        %v511 = vsel %vm319, %v503, %v510
        %v513 = vshrl.u32 %v309, 16
        %v515 = vrot.slane %v513, 7
        %v516 = vshll.u32 %v309, 16
        %v518 = vor.u32 %v515, %v516
        %v519 = vrot.slane %v515, 4
        %v521 = vshrl.u32 %v310, 16
        %v523 = vrot.slane %v521, 7
        %v524 = vshll.u32 %v310, 16
        %v526 = vor.u32 %v523, %v524
        %v527 = vsel %vm319, %v519, %v526
        %v529 = vshrl.u32 %v311, 16
        %v531 = vrot.slane %v529, 7
        %v532 = vshll.u32 %v311, 16
        %v534 = vor.u32 %v531, %v532
        %v535 = vrot.slane %v531, 4
        %v537 = vshrl.u32 %v312, 16
        %v539 = vrot.slane %v537, 7
        %v540 = vshll.u32 %v312, 16
        %v542 = vor.u32 %v539, %v540
        %v543 = vsel %vm319, %v535, %v542
        %v545 = vshrl.u32 %v313, 16
        %v547 = vrot.slane %v545, 7
        %v548 = vshll.u32 %v313, 16
        %v550 = vor.u32 %v547, %v548
        %v551 = vrot.slane %v547, 4
        %v553 = vshrl.u32 %v314, 16
        %v555 = vrot.slane %v553, 7
        %v556 = vshll.u32 %v314, 16
        %v558 = vor.u32 %v555, %v556
        %v559 = vsel %vm319, %v551, %v558
        %v561 = vshrl.u32 %v315, 16
        %v563 = vrot.slane %v561, 7
        %v564 = vshll.u32 %v315, 16
        %v566 = vor.u32 %v563, %v564
        %v567 = vrot.slane %v563, 4
        %v569 = vshrl.u32 %v316, 16
        %v571 = vrot.slane %v569, 7
        %v572 = vshll.u32 %v316, 16
        %v574 = vor.u32 %v571, %v572
        %v575 = vsel %vm319, %v567, %v574
        %s608 = scalar_lea.vmem [#allocation2], 24
        %vm609 = vcmask 27648
        %vm610 = vsmask.f32 7938
        %vm611 = vmand %vm609, %vm610
        %v612 = vld [vmem:[%s608] sm:$0xf]
        %v613 = vsel %vm611, %v326, %v612
        %614 = vst [vmem:[%s608] sm:$0xf] %v613
        %vm615 = vcmask 27648
        %616 = vst.msk [vmem:[%s608 + $0xc] sm:$0xf] %vm615, %v335
        %v617 = vld [vmem:[%s608 + $0x18] sm:$0xf]
        %v618 = vsel %vm611, %v342, %v617
        %619 = vst [vmem:[%s608 + $0x18] sm:$0xf] %v618
        %620 = vst.msk [vmem:[%s608 + $0x24] sm:$0xf] %vm615, %v351
        %v621 = vld [vmem:[%s608 + $0x30] sm:$0xf]
        %v622 = vsel %vm611, %v358, %v621
        %623 = vst [vmem:[%s608 + $0x30] sm:$0xf] %v622
        %624 = vst.msk [vmem:[%s608 + $0x3c] sm:$0xf] %vm615, %v367
        %v625 = vld [vmem:[%s608 + $0x48] sm:$0xf]
        %v626 = vsel %vm611, %v374, %v625
        %627 = vst [vmem:[%s608 + $0x48] sm:$0xf] %v626
        %628 = vst.msk [vmem:[%s608 + $0x54] sm:$0xf] %vm615, %v383
        %v629 = vld [vmem:[%s608 + $0x60] sm:$0xf]
        %v630 = vsel %vm611, %v390, %v629
        %631 = vst [vmem:[%s608 + $0x60] sm:$0xf] %v630
        %632 = vst.msk [vmem:[%s608 + $0x6c] sm:$0xf] %vm615, %v399
        %v633 = vld [vmem:[%s608 + $0x78] sm:$0xf]
        %v634 = vsel %vm611, %v406, %v633
        %635 = vst [vmem:[%s608 + $0x78] sm:$0xf] %v634
        %636 = vst.msk [vmem:[%s608 + $0x84] sm:$0xf] %vm615, %v415
        %v637 = vld [vmem:[%s608 + $0x90] sm:$0xf]
        %v638 = vsel %vm611, %v422, %v637
        %639 = vst [vmem:[%s608 + $0x90] sm:$0xf] %v638
        %640 = vst.msk [vmem:[%s608 + $0x9c] sm:$0xf] %vm615, %v431
        %v641 = vld [vmem:[%s608 + $0xa8] sm:$0xf]
        %v642 = vsel %vm611, %v438, %v641
        %643 = vst [vmem:[%s608 + $0xa8] sm:$0xf] %v642
        %644 = vst.msk [vmem:[%s608 + $0xb4] sm:$0xf] %vm615, %v447
        %v645 = vld [vmem:[%s608 + $0xc0] sm:$0xf]
        %v646 = vsel %vm611, %v454, %v645
        %647 = vst [vmem:[%s608 + $0xc0] sm:$0xf] %v646
        %648 = vst.msk [vmem:[%s608 + $0xcc] sm:$0xf] %vm615, %v463
        %v649 = vld [vmem:[%s608 + $0xd8] sm:$0xf]
        %v650 = vsel %vm611, %v470, %v649
        %651 = vst [vmem:[%s608 + $0xd8] sm:$0xf] %v650
        %652 = vst.msk [vmem:[%s608 + $0xe4] sm:$0xf] %vm615, %v479
        %v653 = vld [vmem:[%s608 + $0xf0] sm:$0xf]
        %v654 = vsel %vm611, %v486, %v653
        %655 = vst [vmem:[%s608 + $0xf0] sm:$0xf] %v654
        %656 = vst.msk [vmem:[%s608 + $0xfc] sm:$0xf] %vm615, %v495
        %v657 = vld [vmem:[%s608 + $0x108] sm:$0xf]
        %v658 = vsel %vm611, %v502, %v657
        %659 = vst [vmem:[%s608 + $0x108] sm:$0xf] %v658
        %660 = vst.msk [vmem:[%s608 + $0x114] sm:$0xf] %vm615, %v511
        %v661 = vld [vmem:[%s608 + $0x120] sm:$0xf]
        %v662 = vsel %vm611, %v518, %v661
        %663 = vst [vmem:[%s608 + $0x120] sm:$0xf] %v662
        %664 = vst.msk [vmem:[%s608 + $0x12c] sm:$0xf] %vm615, %v527
        %v665 = vld [vmem:[%s608 + $0x138] sm:$0xf]
        %v666 = vsel %vm611, %v534, %v665
        %667 = vst [vmem:[%s608 + $0x138] sm:$0xf] %v666
        %668 = vst.msk [vmem:[%s608 + $0x144] sm:$0xf] %vm615, %v543
        %v669 = vld [vmem:[%s608 + $0x150] sm:$0xf]
        %v670 = vsel %vm611, %v550, %v669
        %671 = vst [vmem:[%s608 + $0x150] sm:$0xf] %v670
        %672 = vst.msk [vmem:[%s608 + $0x15c] sm:$0xf] %vm615, %v559
        %v673 = vld [vmem:[%s608 + $0x168] sm:$0xf]
        %v674 = vsel %vm611, %v566, %v673
        %675 = vst [vmem:[%s608 + $0x168] sm:$0xf] %v674
        %676 = vst.msk [vmem:[%s608 + $0x174] sm:$0xf] %vm615, %v575
        %677 = vst.msk [vmem:[%s608 + $0x4] sm:$0xf] %vm615, %v285
        %678 = vst.msk [vmem:[%s608 + $0x10] sm:$0xf] %vm615, %v286
        %679 = vst.msk [vmem:[%s608 + $0x1c] sm:$0xf] %vm615, %v287
        %680 = vst.msk [vmem:[%s608 + $0x28] sm:$0xf] %vm615, %v288
        %681 = vst.msk [vmem:[%s608 + $0x34] sm:$0xf] %vm615, %v289
        %682 = vst.msk [vmem:[%s608 + $0x40] sm:$0xf] %vm615, %v290
        %683 = vst.msk [vmem:[%s608 + $0x4c] sm:$0xf] %vm615, %v291
        %684 = vst.msk [vmem:[%s608 + $0x58] sm:$0xf] %vm615, %v292
        %685 = vst.msk [vmem:[%s608 + $0x64] sm:$0xf] %vm615, %v293
        %686 = vst.msk [vmem:[%s608 + $0x70] sm:$0xf] %vm615, %v294
        %687 = vst.msk [vmem:[%s608 + $0x7c] sm:$0xf] %vm615, %v295
        %688 = vst.msk [vmem:[%s608 + $0x88] sm:$0xf] %vm615, %v296
        %689 = vst.msk [vmem:[%s608 + $0x94] sm:$0xf] %vm615, %v297
        %690 = vst.msk [vmem:[%s608 + $0xa0] sm:$0xf] %vm615, %v298
        %691 = vst.msk [vmem:[%s608 + $0xac] sm:$0xf] %vm615, %v299
        %692 = vst.msk [vmem:[%s608 + $0xb8] sm:$0xf] %vm615, %v300
        %693 = vst.msk [vmem:[%s608 + $0xc4] sm:$0xf] %vm615, %v301
        %694 = vst.msk [vmem:[%s608 + $0xd0] sm:$0xf] %vm615, %v302
        %695 = vst.msk [vmem:[%s608 + $0xdc] sm:$0xf] %vm615, %v303
        %696 = vst.msk [vmem:[%s608 + $0xe8] sm:$0xf] %vm615, %v304
        %697 = vst.msk [vmem:[%s608 + $0xf4] sm:$0xf] %vm615, %v305
        %698 = vst.msk [vmem:[%s608 + $0x100] sm:$0xf] %vm615, %v306
        %699 = vst.msk [vmem:[%s608 + $0x10c] sm:$0xf] %vm615, %v307
        %700 = vst.msk [vmem:[%s608 + $0x118] sm:$0xf] %vm615, %v308
        %701 = vst.msk [vmem:[%s608 + $0x124] sm:$0xf] %vm615, %v309
        %702 = vst.msk [vmem:[%s608 + $0x130] sm:$0xf] %vm615, %v310
        %703 = vst.msk [vmem:[%s608 + $0x13c] sm:$0xf] %vm615, %v311
        %704 = vst.msk [vmem:[%s608 + $0x148] sm:$0xf] %vm615, %v312
        %705 = vst.msk [vmem:[%s608 + $0x154] sm:$0xf] %vm615, %v313
        %706 = vst.msk [vmem:[%s608 + $0x160] sm:$0xf] %vm615, %v314
        %707 = vst.msk [vmem:[%s608 + $0x16c] sm:$0xf] %vm615, %v315
        %708 = vst.msk [vmem:[%s608 + $0x178] sm:$0xf] %vm615, %v316
        %vm709 = vsmask.f32 3328
        %vm710 = vsmask.f32 7440
        %vm711 = vmor %vm709, %vm710
        %v712 = vrot.slane %v321, 4
        %v713 = vrot.slane %v324, 5
        %v714 = vor.u32 %v712, %v713
        %v715 = vrot.slane %v714, 4
        %v716 = vrot.slane %v332, 5
        %v717 = vsel %vm711, %v715, %v716
        %v718 = vrot.slane %v329, 4
        %v719 = vor.u32 %v718, %v716
        %v720 = vrot.slane %v719, 4
        %v721 = vrot.slane %v337, 4
        %v722 = vrot.slane %v340, 5
        %v723 = vor.u32 %v721, %v722
        %v724 = vrot.slane %v723, 4
        %v725 = vrot.slane %v348, 5
        %v726 = vsel %vm711, %v724, %v725
        %v727 = vrot.slane %v345, 4
        %v728 = vor.u32 %v727, %v725
        %v729 = vrot.slane %v728, 4
        %v730 = vrot.slane %v353, 4
        %v731 = vrot.slane %v356, 5
        %v732 = vor.u32 %v730, %v731
        %v733 = vrot.slane %v732, 4
        %v734 = vrot.slane %v364, 5
        %v735 = vsel %vm711, %v733, %v734
        %v736 = vrot.slane %v361, 4
        %v737 = vor.u32 %v736, %v734
        %v738 = vrot.slane %v737, 4
        %v739 = vrot.slane %v369, 4
        %v740 = vrot.slane %v372, 5
        %v741 = vor.u32 %v739, %v740
        %v742 = vrot.slane %v741, 4
        %v743 = vrot.slane %v380, 5
        %v744 = vsel %vm711, %v742, %v743
        %v745 = vrot.slane %v377, 4
        %v746 = vor.u32 %v745, %v743
        %v747 = vrot.slane %v746, 4
        %v748 = vrot.slane %v385, 4
        %v749 = vrot.slane %v388, 5
        %v750 = vor.u32 %v748, %v749
        %v751 = vrot.slane %v750, 4
        %v752 = vrot.slane %v396, 5
        %v753 = vsel %vm711, %v751, %v752
        %v754 = vrot.slane %v393, 4
        %v755 = vor.u32 %v754, %v752
        %v756 = vrot.slane %v755, 4
        %v757 = vrot.slane %v401, 4
        %v758 = vrot.slane %v404, 5
        %v759 = vor.u32 %v757, %v758
        %v760 = vrot.slane %v759, 4
        %v761 = vrot.slane %v412, 5
        %v762 = vsel %vm711, %v760, %v761
        %v763 = vrot.slane %v409, 4
        %v764 = vor.u32 %v763, %v761
        %v765 = vrot.slane %v764, 4
        %v766 = vrot.slane %v417, 4
        %v767 = vrot.slane %v420, 5
        %v768 = vor.u32 %v766, %v767
        %v769 = vrot.slane %v768, 4
        %v770 = vrot.slane %v428, 5
        %v771 = vsel %vm711, %v769, %v770
        %v772 = vrot.slane %v425, 4
        %v773 = vor.u32 %v772, %v770
        %v774 = vrot.slane %v773, 4
        %v775 = vrot.slane %v433, 4
        %v776 = vrot.slane %v436, 5
        %v777 = vor.u32 %v775, %v776
        %v778 = vrot.slane %v777, 4
        %v779 = vrot.slane %v444, 5
        %v780 = vsel %vm711, %v778, %v779
        %v781 = vrot.slane %v441, 4
        %v782 = vor.u32 %v781, %v779
        %v783 = vrot.slane %v782, 4
        %v784 = vrot.slane %v449, 4
        %v785 = vrot.slane %v452, 5
        %v786 = vor.u32 %v784, %v785
        %v787 = vrot.slane %v786, 4
        %v788 = vrot.slane %v460, 5
        %v789 = vsel %vm711, %v787, %v788
        %v790 = vrot.slane %v457, 4
        %v791 = vor.u32 %v790, %v788
        %v792 = vrot.slane %v791, 4
        %v793 = vrot.slane %v465, 4
        %v794 = vrot.slane %v468, 5
        %v795 = vor.u32 %v793, %v794
        %v796 = vrot.slane %v795, 4
        %v797 = vrot.slane %v476, 5
        %v798 = vsel %vm711, %v796, %v797
        %v799 = vrot.slane %v473, 4
        %v800 = vor.u32 %v799, %v797
        %v801 = vrot.slane %v800, 4
        %v802 = vrot.slane %v481, 4
        %v803 = vrot.slane %v484, 5
        %v804 = vor.u32 %v802, %v803
        %v805 = vrot.slane %v804, 4
        %v806 = vrot.slane %v492, 5
        %v807 = vsel %vm711, %v805, %v806
        %v808 = vrot.slane %v489, 4
        %v809 = vor.u32 %v808, %v806
        %v810 = vrot.slane %v809, 4
        %v811 = vrot.slane %v497, 4
        %v812 = vrot.slane %v500, 5
        %v813 = vor.u32 %v811, %v812
        %v814 = vrot.slane %v813, 4
        %v815 = vrot.slane %v508, 5
        %v816 = vsel %vm711, %v814, %v815
        %v817 = vrot.slane %v505, 4
        %v818 = vor.u32 %v817, %v815
        %v819 = vrot.slane %v818, 4
        %v820 = vrot.slane %v513, 4
        %v821 = vrot.slane %v516, 5
        %v822 = vor.u32 %v820, %v821
        %v823 = vrot.slane %v822, 4
        %v824 = vrot.slane %v524, 5
        %v825 = vsel %vm711, %v823, %v824
        %v826 = vrot.slane %v521, 4
        %v827 = vor.u32 %v826, %v824
        %v828 = vrot.slane %v827, 4
        %v829 = vrot.slane %v529, 4
        %v830 = vrot.slane %v532, 5
        %v831 = vor.u32 %v829, %v830
        %v832 = vrot.slane %v831, 4
        %v833 = vrot.slane %v540, 5
        %v834 = vsel %vm711, %v832, %v833
        %v835 = vrot.slane %v537, 4
        %v836 = vor.u32 %v835, %v833
        %v837 = vrot.slane %v836, 4
        %v838 = vrot.slane %v545, 4
        %v839 = vrot.slane %v548, 5
        %v840 = vor.u32 %v838, %v839
        %v841 = vrot.slane %v840, 4
        %v842 = vrot.slane %v556, 5
        %v843 = vsel %vm711, %v841, %v842
        %v844 = vrot.slane %v553, 4
        %v845 = vor.u32 %v844, %v842
        %v846 = vrot.slane %v845, 4
        %v847 = vrot.slane %v561, 4
        %v848 = vrot.slane %v564, 5
        %v849 = vor.u32 %v847, %v848
        %v850 = vrot.slane %v849, 4
        %v851 = vrot.slane %v572, 5
        %v852 = vsel %vm711, %v850, %v851
        %v853 = vrot.slane %v569, 4
        %v854 = vor.u32 %v853, %v851
        %v855 = vrot.slane %v854, 4
        %888 = vst.msk [vmem:[%s608 + $0x8] sm:$0xf] %vm615, %v717
        %vm889 = vmand %vm609, %vm709
        %v890 = vld [vmem:[%s608 + $0x14] sm:$0xf]
        %v891 = vsel %vm889, %v720, %v890
        %892 = vst [vmem:[%s608 + $0x14] sm:$0xf] %v891
        %893 = vst.msk [vmem:[%s608 + $0x20] sm:$0xf] %vm615, %v726
        %v894 = vld [vmem:[%s608 + $0x2c] sm:$0xf]
        %v895 = vsel %vm889, %v729, %v894
        %896 = vst [vmem:[%s608 + $0x2c] sm:$0xf] %v895
        %897 = vst.msk [vmem:[%s608 + $0x38] sm:$0xf] %vm615, %v735
        %v898 = vld [vmem:[%s608 + $0x44] sm:$0xf]
        %v899 = vsel %vm889, %v738, %v898
        %900 = vst [vmem:[%s608 + $0x44] sm:$0xf] %v899
        %901 = vst.msk [vmem:[%s608 + $0x50] sm:$0xf] %vm615, %v744
        %v902 = vld [vmem:[%s608 + $0x5c] sm:$0xf]
        %v903 = vsel %vm889, %v747, %v902
        %904 = vst [vmem:[%s608 + $0x5c] sm:$0xf] %v903
        %905 = vst.msk [vmem:[%s608 + $0x68] sm:$0xf] %vm615, %v753
        %v906 = vld [vmem:[%s608 + $0x74] sm:$0xf]
        %v907 = vsel %vm889, %v756, %v906
        %908 = vst [vmem:[%s608 + $0x74] sm:$0xf] %v907
        %909 = vst.msk [vmem:[%s608 + $0x80] sm:$0xf] %vm615, %v762
        %v910 = vld [vmem:[%s608 + $0x8c] sm:$0xf]
        %v911 = vsel %vm889, %v765, %v910
        %912 = vst [vmem:[%s608 + $0x8c] sm:$0xf] %v911
        %913 = vst.msk [vmem:[%s608 + $0x98] sm:$0xf] %vm615, %v771
        %v914 = vld [vmem:[%s608 + $0xa4] sm:$0xf]
        %v915 = vsel %vm889, %v774, %v914
        %916 = vst [vmem:[%s608 + $0xa4] sm:$0xf] %v915
        %917 = vst.msk [vmem:[%s608 + $0xb0] sm:$0xf] %vm615, %v780
        %v918 = vld [vmem:[%s608 + $0xbc] sm:$0xf]
        %v919 = vsel %vm889, %v783, %v918
        %920 = vst [vmem:[%s608 + $0xbc] sm:$0xf] %v919
        %921 = vst.msk [vmem:[%s608 + $0xc8] sm:$0xf] %vm615, %v789
        %v922 = vld [vmem:[%s608 + $0xd4] sm:$0xf]
        %v923 = vsel %vm889, %v792, %v922
        %924 = vst [vmem:[%s608 + $0xd4] sm:$0xf] %v923
        %925 = vst.msk [vmem:[%s608 + $0xe0] sm:$0xf] %vm615, %v798
        %v926 = vld [vmem:[%s608 + $0xec] sm:$0xf]
        %v927 = vsel %vm889, %v801, %v926
        %928 = vst [vmem:[%s608 + $0xec] sm:$0xf] %v927
        %929 = vst.msk [vmem:[%s608 + $0xf8] sm:$0xf] %vm615, %v807
        %v930 = vld [vmem:[%s608 + $0x104] sm:$0xf]
        %v931 = vsel %vm889, %v810, %v930
        %932 = vst [vmem:[%s608 + $0x104] sm:$0xf] %v931
        %933 = vst.msk [vmem:[%s608 + $0x110] sm:$0xf] %vm615, %v816
        %v934 = vld [vmem:[%s608 + $0x11c] sm:$0xf]
        %v935 = vsel %vm889, %v819, %v934
        %936 = vst [vmem:[%s608 + $0x11c] sm:$0xf] %v935
        %937 = vst.msk [vmem:[%s608 + $0x128] sm:$0xf] %vm615, %v825
        %v938 = vld [vmem:[%s608 + $0x134] sm:$0xf]
        %v939 = vsel %vm889, %v828, %v938
        %940 = vst [vmem:[%s608 + $0x134] sm:$0xf] %v939
        %941 = vst.msk [vmem:[%s608 + $0x140] sm:$0xf] %vm615, %v834
        %v942 = vld [vmem:[%s608 + $0x14c] sm:$0xf]
        %v943 = vsel %vm889, %v837, %v942
        %944 = vst [vmem:[%s608 + $0x14c] sm:$0xf] %v943
        %945 = vst.msk [vmem:[%s608 + $0x158] sm:$0xf] %vm615, %v843
        %v946 = vld [vmem:[%s608 + $0x164] sm:$0xf]
        %v947 = vsel %vm889, %v846, %v946
        %948 = vst [vmem:[%s608 + $0x164] sm:$0xf] %v947
        %949 = vst.msk [vmem:[%s608 + $0x170] sm:$0xf] %vm615, %v852
        %v950 = vld [vmem:[%s608 + $0x17c] sm:$0xf]
        %v951 = vsel %vm889, %v855, %v950
        %952 = vst [vmem:[%s608 + $0x17c] sm:$0xf] %v951
      $region32: #{cna3x3_forward.2} parent=27 // pred_fallthru
        _
      %s953 = smul.u32 %s20, 8
      %s954 = smul.u32 %s953, 6
      %s955 = smul.addr %s954, 4
      %s956 = scalar_lea.vmem [#allocation2], %s955
      %v957 = vld [vmem:[%s956] sm:$0xff]
      %v958 = vld [vmem:[%s956 + $0x8] sm:$0xf]
      %v959 = vld [vmem:[%s956 + $0xc] sm:$0xff]
      %v960 = vld [vmem:[%s956 + $0x14] sm:$0xf]
      %v961 = vld [vmem:[%s956 + $0x18] sm:$0xff]
      %v962 = vld [vmem:[%s956 + $0x20] sm:$0xf]
      %v963 = vld [vmem:[%s956 + $0x24] sm:$0xff]
      %v964 = vld [vmem:[%s956 + $0x2c] sm:$0xf]
      %v965 = vld [vmem:[%s956 + $0x30] sm:$0xff]
      %v966 = vld [vmem:[%s956 + $0x38] sm:$0xf]
      %v967 = vld [vmem:[%s956 + $0x3c] sm:$0xff]
      %v968 = vld [vmem:[%s956 + $0x44] sm:$0xf]
      %v969 = vld [vmem:[%s956 + $0x48] sm:$0xff]
      %v970 = vld [vmem:[%s956 + $0x50] sm:$0xf]
      %v971 = vld [vmem:[%s956 + $0x54] sm:$0xff]
      %v972 = vld [vmem:[%s956 + $0x5c] sm:$0xf]
      %v973 = vld [vmem:[%s956 + $0x60] sm:$0xff]
      %v974 = vld [vmem:[%s956 + $0x68] sm:$0xf]
      %v975 = vld [vmem:[%s956 + $0x6c] sm:$0xff]
      %v976 = vld [vmem:[%s956 + $0x74] sm:$0xf]
      %v977 = vld [vmem:[%s956 + $0x78] sm:$0xff]
      %v978 = vld [vmem:[%s956 + $0x80] sm:$0xf]
      %v979 = vld [vmem:[%s956 + $0x84] sm:$0xff]
      %v980 = vld [vmem:[%s956 + $0x8c] sm:$0xf]
      %v981 = vld [vmem:[%s956 + $0x90] sm:$0xff]
      %v982 = vld [vmem:[%s956 + $0x98] sm:$0xf]
      %v983 = vld [vmem:[%s956 + $0x9c] sm:$0xff]
      %v984 = vld [vmem:[%s956 + $0xa4] sm:$0xf]
      %v985 = vld [vmem:[%s956 + $0xa8] sm:$0xff]
      %v986 = vld [vmem:[%s956 + $0xb0] sm:$0xf]
      %v987 = vld [vmem:[%s956 + $0xb4] sm:$0xff]
      %v988 = vld [vmem:[%s956 + $0xbc] sm:$0xf]
      %v989 = vld [vmem:[%s1] sm:$0xf]
      %v990 = vld [vmem:[%s1 + $0x4] sm:$0xf]
      %v991 = vld [vmem:[%s1 + $0x8] sm:$0xf]
      %v992 = vld [vmem:[%s1 + $0xc] sm:$0xf]
      %v993 = vld [vmem:[%s1 + $0x10] sm:$0xf]
      %v994 = vld [vmem:[%s1 + $0x14] sm:$0xf]
      %v995 = vld [vmem:[%s1 + $0x18] sm:$0xf]
      %v996 = vld [vmem:[%s1 + $0x1c] sm:$0xf]
      %v997 = vld [vmem:[%s1 + $0x20] sm:$0xf]
      %v998 = vld [vmem:[%s1 + $0x24] sm:$0xf]
      %v999 = vld [vmem:[%s1 + $0x28] sm:$0xf]
      %v1000 = vld [vmem:[%s1 + $0x2c] sm:$0xf]
      %v1001 = vld [vmem:[%s1 + $0x30] sm:$0xf]
      %v1002 = vld [vmem:[%s1 + $0x34] sm:$0xf]
      %v1003 = vld [vmem:[%s1 + $0x38] sm:$0xf]
      %v1004 = vld [vmem:[%s1 + $0x3c] sm:$0xf]
      %v1005 = vld [vmem:[%s1 + $0x40] sm:$0xf]
      %v1006 = vld [vmem:[%s1 + $0x44] sm:$0xf]
      %v1007 = vld [vmem:[%s1 + $0x48] sm:$0xf]
      %v1008 = vld [vmem:[%s1 + $0x4c] sm:$0xf]
      %v1009 = vld [vmem:[%s1 + $0x50] sm:$0xf]
      %v1010 = vld [vmem:[%s1 + $0x54] sm:$0xf]
      %v1011 = vld [vmem:[%s1 + $0x58] sm:$0xf]
      %v1012 = vld [vmem:[%s1 + $0x5c] sm:$0xf]
      %v1013 = vld [vmem:[%s1 + $0x60] sm:$0xf]
      %v1014 = vld [vmem:[%s1 + $0x64] sm:$0xf]
      %v1015 = vld [vmem:[%s1 + $0x68] sm:$0xf]
      %v1016 = vld [vmem:[%s1 + $0x6c] sm:$0xf]
      %v1017 = vld [vmem:[%s1 + $0x70] sm:$0xf]
      %v1018 = vld [vmem:[%s1 + $0x74] sm:$0xf]
      %v1019 = vld [vmem:[%s1 + $0x78] sm:$0xf]
      %v1020 = vld [vmem:[%s1 + $0x7c] sm:$0xf]
      %v1021 = vld [vmem:[%s1 + $0x80] sm:$0xf]
      %v1022 = vld [vmem:[%s1 + $0x84] sm:$0xf]
      %v1023 = vld [vmem:[%s1 + $0x88] sm:$0xf]
      %v1024 = vld [vmem:[%s1 + $0x8c] sm:$0xf]
      %v1025 = vld [vmem:[%s1 + $0x90] sm:$0xf]
      %v1026 = vld [vmem:[%s1 + $0x94] sm:$0xf]
      %v1027 = vld [vmem:[%s1 + $0x98] sm:$0xf]
      %v1028 = vld [vmem:[%s1 + $0x9c] sm:$0xf]
      %v1029 = vld [vmem:[%s1 + $0xa0] sm:$0xf]
      %v1030 = vld [vmem:[%s1 + $0xa4] sm:$0xf]
      %v1031 = vld [vmem:[%s1 + $0xa8] sm:$0xf]
      %v1032 = vld [vmem:[%s1 + $0xac] sm:$0xf]
      %v1033 = vld [vmem:[%s1 + $0xb0] sm:$0xf]
      %v1034 = vld [vmem:[%s1 + $0xb4] sm:$0xf]
      %v1035 = vld [vmem:[%s1 + $0xb8] sm:$0xf]
      %v1036 = vld [vmem:[%s1 + $0xbc] sm:$0xf]
      %s1037 = sadd.s32 %s953, 1
      %s1038 = smul.u32 %s1037, 6
      %s1039 = smul.addr %s1038, 4
      %s1040 = scalar_lea.vmem [#allocation2], %s1039
      %v1041 = vld [vmem:[%s1040] sm:$0xff]
      %v1042 = vld [vmem:[%s1040 + $0x8] sm:$0xf]
      %v1043 = vld [vmem:[%s1040 + $0xc] sm:$0xff]
      %v1044 = vld [vmem:[%s1040 + $0x14] sm:$0xf]
      %v1045 = vld [vmem:[%s1040 + $0x18] sm:$0xff]
      %v1046 = vld [vmem:[%s1040 + $0x20] sm:$0xf]
      %v1047 = vld [vmem:[%s1040 + $0x24] sm:$0xff]
      %v1048 = vld [vmem:[%s1040 + $0x2c] sm:$0xf]
      %v1049 = vld [vmem:[%s1040 + $0x30] sm:$0xff]
      %v1050 = vld [vmem:[%s1040 + $0x38] sm:$0xf]
      %v1051 = vld [vmem:[%s1040 + $0x3c] sm:$0xff]
      %v1052 = vld [vmem:[%s1040 + $0x44] sm:$0xf]
      %v1053 = vld [vmem:[%s1040 + $0x48] sm:$0xff]
      %v1054 = vld [vmem:[%s1040 + $0x50] sm:$0xf]
      %v1055 = vld [vmem:[%s1040 + $0x54] sm:$0xff]
      %v1056 = vld [vmem:[%s1040 + $0x5c] sm:$0xf]
      %v1057 = vld [vmem:[%s1040 + $0x60] sm:$0xff]
      %v1058 = vld [vmem:[%s1040 + $0x68] sm:$0xf]
      %v1059 = vld [vmem:[%s1040 + $0x6c] sm:$0xff]
      %v1060 = vld [vmem:[%s1040 + $0x74] sm:$0xf]
      %v1061 = vld [vmem:[%s1040 + $0x78] sm:$0xff]
      %v1062 = vld [vmem:[%s1040 + $0x80] sm:$0xf]
      %v1063 = vld [vmem:[%s1040 + $0x84] sm:$0xff]
      %v1064 = vld [vmem:[%s1040 + $0x8c] sm:$0xf]
      %v1065 = vld [vmem:[%s1040 + $0x90] sm:$0xff]
      %v1066 = vld [vmem:[%s1040 + $0x98] sm:$0xf]
      %v1067 = vld [vmem:[%s1040 + $0x9c] sm:$0xff]
      %v1068 = vld [vmem:[%s1040 + $0xa4] sm:$0xf]
      %v1069 = vld [vmem:[%s1040 + $0xa8] sm:$0xff]
      %v1070 = vld [vmem:[%s1040 + $0xb0] sm:$0xf]
      %v1071 = vld [vmem:[%s1040 + $0xb4] sm:$0xff]
      %v1072 = vld [vmem:[%s1040 + $0xbc] sm:$0xf]
      %s1073 = scalar_lea.vmem %s1, 192
      %v1074 = vld [vmem:[%s1073] sm:$0xf]
      %v1075 = vld [vmem:[%s1073 + $0x4] sm:$0xf]
      %v1076 = vld [vmem:[%s1073 + $0x8] sm:$0xf]
      %v1077 = vld [vmem:[%s1073 + $0xc] sm:$0xf]
      %v1078 = vld [vmem:[%s1073 + $0x10] sm:$0xf]
      %v1079 = vld [vmem:[%s1073 + $0x14] sm:$0xf]
      %v1080 = vld [vmem:[%s1073 + $0x18] sm:$0xf]
      %v1081 = vld [vmem:[%s1073 + $0x1c] sm:$0xf]
      %v1082 = vld [vmem:[%s1073 + $0x20] sm:$0xf]
      %v1083 = vld [vmem:[%s1073 + $0x24] sm:$0xf]
      %v1084 = vld [vmem:[%s1073 + $0x28] sm:$0xf]
      %v1085 = vld [vmem:[%s1073 + $0x2c] sm:$0xf]
      %v1086 = vld [vmem:[%s1073 + $0x30] sm:$0xf]
      %v1087 = vld [vmem:[%s1073 + $0x34] sm:$0xf]
      %v1088 = vld [vmem:[%s1073 + $0x38] sm:$0xf]
      %v1089 = vld [vmem:[%s1073 + $0x3c] sm:$0xf]
      %v1090 = vld [vmem:[%s1073 + $0x40] sm:$0xf]
      %v1091 = vld [vmem:[%s1073 + $0x44] sm:$0xf]
      %v1092 = vld [vmem:[%s1073 + $0x48] sm:$0xf]
      %v1093 = vld [vmem:[%s1073 + $0x4c] sm:$0xf]
      %v1094 = vld [vmem:[%s1073 + $0x50] sm:$0xf]
      %v1095 = vld [vmem:[%s1073 + $0x54] sm:$0xf]
      %v1096 = vld [vmem:[%s1073 + $0x58] sm:$0xf]
      %v1097 = vld [vmem:[%s1073 + $0x5c] sm:$0xf]
      %v1098 = vld [vmem:[%s1073 + $0x60] sm:$0xf]
      %v1099 = vld [vmem:[%s1073 + $0x64] sm:$0xf]
      %v1100 = vld [vmem:[%s1073 + $0x68] sm:$0xf]
      %v1101 = vld [vmem:[%s1073 + $0x6c] sm:$0xf]
      %v1102 = vld [vmem:[%s1073 + $0x70] sm:$0xf]
      %v1103 = vld [vmem:[%s1073 + $0x74] sm:$0xf]
      %v1104 = vld [vmem:[%s1073 + $0x78] sm:$0xf]
      %v1105 = vld [vmem:[%s1073 + $0x7c] sm:$0xf]
      %v1106 = vld [vmem:[%s1073 + $0x80] sm:$0xf]
      %v1107 = vld [vmem:[%s1073 + $0x84] sm:$0xf]
      %v1108 = vld [vmem:[%s1073 + $0x88] sm:$0xf]
      %v1109 = vld [vmem:[%s1073 + $0x8c] sm:$0xf]
      %v1110 = vld [vmem:[%s1073 + $0x90] sm:$0xf]
      %v1111 = vld [vmem:[%s1073 + $0x94] sm:$0xf]
      %v1112 = vld [vmem:[%s1073 + $0x98] sm:$0xf]
      %v1113 = vld [vmem:[%s1073 + $0x9c] sm:$0xf]
      %v1114 = vld [vmem:[%s1073 + $0xa0] sm:$0xf]
      %v1115 = vld [vmem:[%s1073 + $0xa4] sm:$0xf]
      %v1116 = vld [vmem:[%s1073 + $0xa8] sm:$0xf]
      %v1117 = vld [vmem:[%s1073 + $0xac] sm:$0xf]
      %v1118 = vld [vmem:[%s1073 + $0xb0] sm:$0xf]
      %v1119 = vld [vmem:[%s1073 + $0xb4] sm:$0xf]
      %v1120 = vld [vmem:[%s1073 + $0xb8] sm:$0xf]
      %v1121 = vld [vmem:[%s1073 + $0xbc] sm:$0xf]
      %v1154 = vunpack.c.l.b16 %v1041
      %v1155 = vunpack.c.h.b16 %v1041
      %v1156 = vunpack.c.l.b16 %v1042
      %v1157 = vunpack.c.l.b16 %v1043
      %v1158 = vunpack.c.h.b16 %v1043
      %v1159 = vunpack.c.l.b16 %v1044
      %v1160 = vunpack.c.l.b16 %v1045
      %v1161 = vunpack.c.h.b16 %v1045
      %v1162 = vunpack.c.l.b16 %v1046
      %v1163 = vunpack.c.l.b16 %v1047
      %v1164 = vunpack.c.h.b16 %v1047
      %v1165 = vunpack.c.l.b16 %v1048
      %v1166 = vunpack.c.l.b16 %v1049
      %v1167 = vunpack.c.h.b16 %v1049
      %v1168 = vunpack.c.l.b16 %v1050
      %v1169 = vunpack.c.l.b16 %v1051
      %v1170 = vunpack.c.h.b16 %v1051
      %v1171 = vunpack.c.l.b16 %v1052
      %v1172 = vunpack.c.l.b16 %v1053
      %v1173 = vunpack.c.h.b16 %v1053
      %v1174 = vunpack.c.l.b16 %v1054
      %v1175 = vunpack.c.l.b16 %v1055
      %v1176 = vunpack.c.h.b16 %v1055
      %v1177 = vunpack.c.l.b16 %v1056
      %v1178 = vunpack.c.l.b16 %v1057
      %v1179 = vunpack.c.h.b16 %v1057
      %v1180 = vunpack.c.l.b16 %v1058
      %v1181 = vunpack.c.l.b16 %v1059
      %v1182 = vunpack.c.h.b16 %v1059
      %v1183 = vunpack.c.l.b16 %v1060
      %v1184 = vunpack.c.l.b16 %v1061
      %v1185 = vunpack.c.h.b16 %v1061
      %v1186 = vunpack.c.l.b16 %v1062
      %v1187 = vunpack.c.l.b16 %v1063
      %v1188 = vunpack.c.h.b16 %v1063
      %v1189 = vunpack.c.l.b16 %v1064
      %v1190 = vunpack.c.l.b16 %v1065
      %v1191 = vunpack.c.h.b16 %v1065
      %v1192 = vunpack.c.l.b16 %v1066
      %v1193 = vunpack.c.l.b16 %v1067
      %v1194 = vunpack.c.h.b16 %v1067
      %v1195 = vunpack.c.l.b16 %v1068
      %v1196 = vunpack.c.l.b16 %v1069
      %v1197 = vunpack.c.h.b16 %v1069
      %v1198 = vunpack.c.l.b16 %v1070
      %v1199 = vunpack.c.l.b16 %v1071
      %v1200 = vunpack.c.h.b16 %v1071
      %v1201 = vunpack.c.l.b16 %v1072
      %v1202 = vpack.c.b16 %v1157, %v1154
      %v1203 = vpack.c.b16 %v1158, %v1155
      %v1204 = vpack.c.b16 %v1159, %v1156
      %v1205 = vpack.c.b16 %v1163, %v1160
      %v1206 = vpack.c.b16 %v1164, %v1161
      %v1207 = vpack.c.b16 %v1165, %v1162
      %v1208 = vpack.c.b16 %v1169, %v1166
      %v1209 = vpack.c.b16 %v1170, %v1167
      %v1210 = vpack.c.b16 %v1171, %v1168
      %v1211 = vpack.c.b16 %v1175, %v1172
      %v1212 = vpack.c.b16 %v1176, %v1173
      %v1213 = vpack.c.b16 %v1177, %v1174
      %v1214 = vpack.c.b16 %v1181, %v1178
      %v1215 = vpack.c.b16 %v1182, %v1179
      %v1216 = vpack.c.b16 %v1183, %v1180
      %v1217 = vpack.c.b16 %v1187, %v1184
      %v1218 = vpack.c.b16 %v1188, %v1185
      %v1219 = vpack.c.b16 %v1189, %v1186
      %v1220 = vpack.c.b16 %v1193, %v1190
      %v1221 = vpack.c.b16 %v1194, %v1191
      %v1222 = vpack.c.b16 %v1195, %v1192
      %v1223 = vpack.c.b16 %v1199, %v1196
      %v1224 = vpack.c.b16 %v1200, %v1197
      %v1225 = vpack.c.b16 %v1201, %v1198
      %v1298 = vunpack.c.l.b16 %v1074
      %v1299 = vunpack.c.l.b16 %v1075
      %v1300 = vunpack.c.l.b16 %v1076
      %v1301 = vunpack.c.l.b16 %v1077
      %v1302 = vunpack.c.l.b16 %v1078
      %v1303 = vunpack.c.l.b16 %v1079
      %v1304 = vunpack.c.l.b16 %v1080
      %v1305 = vunpack.c.l.b16 %v1081
      %v1306 = vunpack.c.l.b16 %v1082
      %v1307 = vunpack.c.l.b16 %v1083
      %v1308 = vunpack.c.l.b16 %v1084
      %v1309 = vunpack.c.l.b16 %v1085
      %v1310 = vunpack.c.l.b16 %v1086
      %v1311 = vunpack.c.l.b16 %v1087
      %v1312 = vunpack.c.l.b16 %v1088
      %v1313 = vunpack.c.l.b16 %v1089
      %v1314 = vunpack.c.l.b16 %v1090
      %v1315 = vunpack.c.l.b16 %v1091
      %v1316 = vunpack.c.l.b16 %v1092
      %v1317 = vunpack.c.l.b16 %v1093
      %v1318 = vunpack.c.l.b16 %v1094
      %v1319 = vunpack.c.l.b16 %v1095
      %v1320 = vunpack.c.l.b16 %v1096
      %v1321 = vunpack.c.l.b16 %v1097
      %v1322 = vunpack.c.l.b16 %v1098
      %v1323 = vunpack.c.l.b16 %v1099
      %v1324 = vunpack.c.l.b16 %v1100
      %v1325 = vunpack.c.l.b16 %v1101
      %v1326 = vunpack.c.l.b16 %v1102
      %v1327 = vunpack.c.l.b16 %v1103
      %v1328 = vunpack.c.l.b16 %v1104
      %v1329 = vunpack.c.l.b16 %v1105
      %v1330 = vunpack.c.l.b16 %v1106
      %v1331 = vunpack.c.l.b16 %v1107
      %v1332 = vunpack.c.l.b16 %v1108
      %v1333 = vunpack.c.l.b16 %v1109
      %v1334 = vunpack.c.l.b16 %v1110
      %v1335 = vunpack.c.l.b16 %v1111
      %v1336 = vunpack.c.l.b16 %v1112
      %v1337 = vunpack.c.l.b16 %v1113
      %v1338 = vunpack.c.l.b16 %v1114
      %v1339 = vunpack.c.l.b16 %v1115
      %v1340 = vunpack.c.l.b16 %v1116
      %v1341 = vunpack.c.l.b16 %v1117
      %v1342 = vunpack.c.l.b16 %v1118
      %v1343 = vunpack.c.l.b16 %v1119
      %v1344 = vunpack.c.l.b16 %v1120
      %v1345 = vunpack.c.l.b16 %v1121
      %v1346 = vpack.c.b16 %v1299, %v1298
      %v1347 = vpack.c.b16 %v1301, %v1300
      %v1348 = vpack.c.b16 %v1303, %v1302
      %v1349 = vpack.c.b16 %v1305, %v1304
      %v1350 = vpack.c.b16 %v1307, %v1306
      %v1351 = vpack.c.b16 %v1309, %v1308
      %v1352 = vpack.c.b16 %v1311, %v1310
      %v1353 = vpack.c.b16 %v1313, %v1312
      %v1354 = vpack.c.b16 %v1315, %v1314
      %v1355 = vpack.c.b16 %v1317, %v1316
      %v1356 = vpack.c.b16 %v1319, %v1318
      %v1357 = vpack.c.b16 %v1321, %v1320
      %v1358 = vpack.c.b16 %v1323, %v1322
      %v1359 = vpack.c.b16 %v1325, %v1324
      %v1360 = vpack.c.b16 %v1327, %v1326
      %v1361 = vpack.c.b16 %v1329, %v1328
      %v1362 = vpack.c.b16 %v1331, %v1330
      %v1363 = vpack.c.b16 %v1333, %v1332
      %v1364 = vpack.c.b16 %v1335, %v1334
      %v1365 = vpack.c.b16 %v1337, %v1336
      %v1366 = vpack.c.b16 %v1339, %v1338
      %v1367 = vpack.c.b16 %v1341, %v1340
      %v1368 = vpack.c.b16 %v1343, %v1342
      %v1369 = vpack.c.b16 %v1345, %v1344
      %1394 = vmatprep.subr.bf16.mxu0 0
      %1395 = vmatpush1.bf16.msra.mxu0 %v1353
      %1396 = vmatprep.subr.bf16.mxu0 0
      %1397 = vmatpush1.bf16.msra.mxu0 %v1352
      %1398 = vmatprep.subr.bf16.mxu0 0
      %1399 = vmatpush1.bf16.msra.mxu0 %v1351
      %1400 = vmatprep.subr.bf16.mxu0 0
      %1401 = vmatpush1.bf16.msra.mxu0 %v1350
      %1402 = vmatprep.subr.bf16.mxu0 0
      %1403 = vmatpush1.bf16.msra.mxu0 %v1349
      %1404 = vmatprep.subr.bf16.mxu0 0
      %1405 = vmatpush1.bf16.msra.mxu0 %v1348
      %1406 = vmatprep.subr.bf16.mxu0 0
      %1407 = vmatpush1.bf16.msra.mxu0 %v1347
      %1408 = vmatprep.subr.bf16.mxu0 0
      %1409 = vmatpush1.bf16.msra.mxu0 %v1346
      %1410 = vmatprep.subr.bf16.mxu0 0
      %1411 = vmatpush2.bf16.msra.mxu0 %v1361
      %1412 = vmatprep.subr.bf16.mxu0 0
      %1413 = vmatpush2.bf16.msra.mxu0 %v1360
      %1414 = vmatprep.subr.bf16.mxu0 0
      %1415 = vmatpush2.bf16.msra.mxu0 %v1359
      %1416 = vmatprep.subr.bf16.mxu0 0
      %1417 = vmatpush2.bf16.msra.mxu0 %v1358
      %1418 = vmatprep.subr.bf16.mxu0 0
      %1419 = vmatpush2.bf16.msra.mxu0 %v1357
      %1420 = vmatprep.subr.bf16.mxu0 0
      %1421 = vmatpush2.bf16.msra.mxu0 %v1356
      %1422 = vmatprep.subr.bf16.mxu0 0
      %1423 = vmatpush2.bf16.msra.mxu0 %v1355
      %1424 = vmatprep.subr.bf16.mxu0 0
      %1425 = vmatpush2.bf16.msra.mxu0 %v1354
      %1426 = vmatprep.mubr.bf16.mxu0 %v1203
      %1427 = vmatmul.mubr.bf16.gmra.mxu0 %v1202
      %v1428 = vpop.f32.mrf.mxu0
      %v1429 = vadd.f32 0.0, %v1428
      %v1430 = vpop.f32.mrf.mxu0
      %v1431 = vpop.f32.mrf.mxu0
      %v1432 = vadd.f32 0.0, %v1431
      %v1433 = vpop.f32.mrf.mxu0
      %1434 = vmatprep.mubr.bf16.mxu0 %v1206
      %1435 = vmatmul.mubr.bf16.gmra.mxu0 %v1205
      %v1436 = vpop.f32.mrf.mxu0
      %v1437 = vadd.f32 0.0, %v1436
      %v1438 = vpop.f32.mrf.mxu0
      %v1439 = vpop.f32.mrf.mxu0
      %v1440 = vadd.f32 0.0, %v1439
      %v1441 = vpop.f32.mrf.mxu0
      %1442 = vmatprep.mubr.bf16.mxu0 %v1209
      %1443 = vmatmul.mubr.bf16.gmra.mxu0 %v1208
      %v1444 = vpop.f32.mrf.mxu0
      %v1445 = vadd.f32 0.0, %v1444
      %v1446 = vpop.f32.mrf.mxu0
      %v1447 = vpop.f32.mrf.mxu0
      %v1448 = vadd.f32 0.0, %v1447
      %v1449 = vpop.f32.mrf.mxu0
      %1450 = vmatprep.mubr.bf16.mxu0 %v1212
      %1451 = vmatmul.mubr.bf16.gmra.mxu0 %v1211
      %v1452 = vpop.f32.mrf.mxu0
      %v1453 = vadd.f32 0.0, %v1452
      %v1454 = vpop.f32.mrf.mxu0
      %v1455 = vpop.f32.mrf.mxu0
      %v1456 = vadd.f32 0.0, %v1455
      %v1457 = vpop.f32.mrf.mxu0
      %1458 = vmatprep.mubr.bf16.mxu0 %v1215
      %1459 = vmatmul.mubr.bf16.gmra.mxu0 %v1214
      %v1460 = vpop.f32.mrf.mxu0
      %v1461 = vadd.f32 0.0, %v1460
      %v1462 = vpop.f32.mrf.mxu0
      %v1463 = vpop.f32.mrf.mxu0
      %v1464 = vadd.f32 0.0, %v1463
      %v1465 = vpop.f32.mrf.mxu0
      %1466 = vmatprep.mubr.bf16.mxu0 %v1218
      %1467 = vmatmul.mubr.bf16.gmra.mxu0 %v1217
      %v1468 = vpop.f32.mrf.mxu0
      %v1469 = vadd.f32 0.0, %v1468
      %v1470 = vpop.f32.mrf.mxu0
      %v1471 = vpop.f32.mrf.mxu0
      %v1472 = vadd.f32 0.0, %v1471
      %v1473 = vpop.f32.mrf.mxu0
      %1474 = vmatprep.mubr.bf16.mxu0 %v1221
      %1475 = vmatmul.mubr.bf16.gmra.mxu0 %v1220
      %v1476 = vpop.f32.mrf.mxu0
      %v1477 = vadd.f32 0.0, %v1476
      %v1478 = vpop.f32.mrf.mxu0
      %v1479 = vpop.f32.mrf.mxu0
      %v1480 = vadd.f32 0.0, %v1479
      %v1481 = vpop.f32.mrf.mxu0
      %1482 = vmatprep.mubr.bf16.mxu0 %v1224
      %1483 = vmatmul.mubr.bf16.gmra.mxu0 %v1223
      %v1484 = vpop.f32.mrf.mxu0
      %v1485 = vadd.f32 0.0, %v1484
      %v1486 = vpop.f32.mrf.mxu0
      %v1487 = vpop.f32.mrf.mxu0
      %v1488 = vadd.f32 0.0, %v1487
      %v1489 = vpop.f32.mrf.mxu0
      %1490 = vdwg.mxu0
      %1491 = vmatprep.subr.bf16.mxu0 0
      %1492 = vmatpush1.bf16.msra.mxu0 %v1369
      %1493 = vmatprep.subr.bf16.mxu0 0
      %1494 = vmatpush1.bf16.msra.mxu0 %v1368
      %1495 = vmatprep.subr.bf16.mxu0 0
      %1496 = vmatpush1.bf16.msra.mxu0 %v1367
      %1497 = vmatprep.subr.bf16.mxu0 0
      %1498 = vmatpush1.bf16.msra.mxu0 %v1366
      %1499 = vmatprep.subr.bf16.mxu0 0
      %1500 = vmatpush1.bf16.msra.mxu0 %v1365
      %1501 = vmatprep.subr.bf16.mxu0 0
      %1502 = vmatpush1.bf16.msra.mxu0 %v1364
      %1503 = vmatprep.subr.bf16.mxu0 0
      %1504 = vmatpush1.bf16.msra.mxu0 %v1363
      %1505 = vmatprep.subr.bf16.mxu0 0
      %1506 = vmatpush1.bf16.msra.mxu0 %v1362
      %1507 = vmatprep.subr.bf16.mxu0 0
      %1508 = vmatpush2.bf16.msra.mxu0 0
      %1509 = vmatprep.subr.bf16.mxu0 0
      %1510 = vmatpush2.bf16.msra.mxu0 0
      %1511 = vmatprep.subr.bf16.mxu0 0
      %1512 = vmatpush2.bf16.msra.mxu0 0
      %1513 = vmatprep.subr.bf16.mxu0 0
      %1514 = vmatpush2.bf16.msra.mxu0 0
      %1515 = vmatprep.subr.bf16.mxu0 0
      %1516 = vmatpush2.bf16.msra.mxu0 0
      %1517 = vmatprep.subr.bf16.mxu0 0
      %1518 = vmatpush2.bf16.msra.mxu0 0
      %1519 = vmatprep.subr.bf16.mxu0 0
      %1520 = vmatpush2.bf16.msra.mxu0 0
      %1521 = vmatprep.subr.bf16.mxu0 0
      %1522 = vmatpush2.bf16.msra.mxu0 0
      %1523 = vmatprep.mubr.bf16.mxu0 0
      %1524 = vmatmul.mubr.bf16.gmra.mxu0 %v1204
      %v1525 = vpop.f32.mrf.mxu0
      %v1526 = vadd.f32 %v1429, %v1525
      %v1527 = vpop.f32.mrf.mxu0
      %v1528 = vpop.f32.mrf.mxu0
      %v1529 = vadd.f32 %v1432, %v1528
      %v1530 = vpop.f32.mrf.mxu0
      %1531 = vmatprep.mubr.bf16.mxu0 0
      %1532 = vmatmul.mubr.bf16.gmra.mxu0 %v1207
      %v1533 = vpop.f32.mrf.mxu0
      %v1534 = vadd.f32 %v1437, %v1533
      %v1535 = vpop.f32.mrf.mxu0
      %v1536 = vpop.f32.mrf.mxu0
      %v1537 = vadd.f32 %v1440, %v1536
      %v1538 = vpop.f32.mrf.mxu0
      %1539 = vmatprep.mubr.bf16.mxu0 0
      %1540 = vmatmul.mubr.bf16.gmra.mxu0 %v1210
      %v1541 = vpop.f32.mrf.mxu0
      %v1542 = vadd.f32 %v1445, %v1541
      %v1543 = vpop.f32.mrf.mxu0
      %v1544 = vpop.f32.mrf.mxu0
      %v1545 = vadd.f32 %v1448, %v1544
      %v1546 = vpop.f32.mrf.mxu0
      %1547 = vmatprep.mubr.bf16.mxu0 0
      %1548 = vmatmul.mubr.bf16.gmra.mxu0 %v1213
      %v1549 = vpop.f32.mrf.mxu0
      %v1550 = vadd.f32 %v1453, %v1549
      %v1551 = vpop.f32.mrf.mxu0
      %v1552 = vpop.f32.mrf.mxu0
      %v1553 = vadd.f32 %v1456, %v1552
      %v1554 = vpop.f32.mrf.mxu0
      %1555 = vmatprep.mubr.bf16.mxu0 0
      %1556 = vmatmul.mubr.bf16.gmra.mxu0 %v1216
      %v1557 = vpop.f32.mrf.mxu0
      %v1558 = vadd.f32 %v1461, %v1557
      %v1559 = vpop.f32.mrf.mxu0
      %v1560 = vpop.f32.mrf.mxu0
      %v1561 = vadd.f32 %v1464, %v1560
      %v1562 = vpop.f32.mrf.mxu0
      %1563 = vmatprep.mubr.bf16.mxu0 0
      %1564 = vmatmul.mubr.bf16.gmra.mxu0 %v1219
      %v1565 = vpop.f32.mrf.mxu0
      %v1566 = vadd.f32 %v1469, %v1565
      %v1567 = vpop.f32.mrf.mxu0
      %v1568 = vpop.f32.mrf.mxu0
      %v1569 = vadd.f32 %v1472, %v1568
      %v1570 = vpop.f32.mrf.mxu0
      %1571 = vmatprep.mubr.bf16.mxu0 0
      %1572 = vmatmul.mubr.bf16.gmra.mxu0 %v1222
      %v1573 = vpop.f32.mrf.mxu0
      %v1574 = vadd.f32 %v1477, %v1573
      %v1575 = vpop.f32.mrf.mxu0
      %v1576 = vpop.f32.mrf.mxu0
      %v1577 = vadd.f32 %v1480, %v1576
      %v1578 = vpop.f32.mrf.mxu0
      %1579 = vmatprep.mubr.bf16.mxu0 0
      %1580 = vmatmul.mubr.bf16.gmra.mxu0 %v1225
      %v1581 = vpop.f32.mrf.mxu0
      %v1582 = vadd.f32 %v1485, %v1581
      %v1583 = vpop.f32.mrf.mxu0
      %v1584 = vpop.f32.mrf.mxu0
      %v1585 = vadd.f32 %v1488, %v1584
      %v1586 = vpop.f32.mrf.mxu0
      %1587 = vdwg.mxu0
      %v1620 = vunpack.c.l.b16 %v957
      %v1621 = vunpack.c.h.b16 %v957
      %v1622 = vunpack.c.l.b16 %v958
      %v1623 = vunpack.c.l.b16 %v959
      %v1624 = vunpack.c.h.b16 %v959
      %v1625 = vunpack.c.l.b16 %v960
      %v1626 = vunpack.c.l.b16 %v961
      %v1627 = vunpack.c.h.b16 %v961
      %v1628 = vunpack.c.l.b16 %v962
      %v1629 = vunpack.c.l.b16 %v963
      %v1630 = vunpack.c.h.b16 %v963
      %v1631 = vunpack.c.l.b16 %v964
      %v1632 = vunpack.c.l.b16 %v965
      %v1633 = vunpack.c.h.b16 %v965
      %v1634 = vunpack.c.l.b16 %v966
      %v1635 = vunpack.c.l.b16 %v967
      %v1636 = vunpack.c.h.b16 %v967
      %v1637 = vunpack.c.l.b16 %v968
      %v1638 = vunpack.c.l.b16 %v969
      %v1639 = vunpack.c.h.b16 %v969
      %v1640 = vunpack.c.l.b16 %v970
      %v1641 = vunpack.c.l.b16 %v971
      %v1642 = vunpack.c.h.b16 %v971
      %v1643 = vunpack.c.l.b16 %v972
      %v1644 = vunpack.c.l.b16 %v973
      %v1645 = vunpack.c.h.b16 %v973
      %v1646 = vunpack.c.l.b16 %v974
      %v1647 = vunpack.c.l.b16 %v975
      %v1648 = vunpack.c.h.b16 %v975
      %v1649 = vunpack.c.l.b16 %v976
      %v1650 = vunpack.c.l.b16 %v977
      %v1651 = vunpack.c.h.b16 %v977
      %v1652 = vunpack.c.l.b16 %v978
      %v1653 = vunpack.c.l.b16 %v979
      %v1654 = vunpack.c.h.b16 %v979
      %v1655 = vunpack.c.l.b16 %v980
      %v1656 = vunpack.c.l.b16 %v981
      %v1657 = vunpack.c.h.b16 %v981
      %v1658 = vunpack.c.l.b16 %v982
      %v1659 = vunpack.c.l.b16 %v983
      %v1660 = vunpack.c.h.b16 %v983
      %v1661 = vunpack.c.l.b16 %v984
      %v1662 = vunpack.c.l.b16 %v985
      %v1663 = vunpack.c.h.b16 %v985
      %v1664 = vunpack.c.l.b16 %v986
      %v1665 = vunpack.c.l.b16 %v987
      %v1666 = vunpack.c.h.b16 %v987
      %v1667 = vunpack.c.l.b16 %v988
      %v1668 = vpack.c.b16 %v1623, %v1620
      %v1669 = vpack.c.b16 %v1624, %v1621
      %v1670 = vpack.c.b16 %v1625, %v1622
      %v1671 = vpack.c.b16 %v1629, %v1626
      %v1672 = vpack.c.b16 %v1630, %v1627
      %v1673 = vpack.c.b16 %v1631, %v1628
      %v1674 = vpack.c.b16 %v1635, %v1632
      %v1675 = vpack.c.b16 %v1636, %v1633
      %v1676 = vpack.c.b16 %v1637, %v1634
      %v1677 = vpack.c.b16 %v1641, %v1638
      %v1678 = vpack.c.b16 %v1642, %v1639
      %v1679 = vpack.c.b16 %v1643, %v1640
      %v1680 = vpack.c.b16 %v1647, %v1644
      %v1681 = vpack.c.b16 %v1648, %v1645
      %v1682 = vpack.c.b16 %v1649, %v1646
      %v1683 = vpack.c.b16 %v1653, %v1650
      %v1684 = vpack.c.b16 %v1654, %v1651
      %v1685 = vpack.c.b16 %v1655, %v1652
      %v1686 = vpack.c.b16 %v1659, %v1656
      %v1687 = vpack.c.b16 %v1660, %v1657
      %v1688 = vpack.c.b16 %v1661, %v1658
      %v1689 = vpack.c.b16 %v1665, %v1662
      %v1690 = vpack.c.b16 %v1666, %v1663
      %v1691 = vpack.c.b16 %v1667, %v1664
      %v1764 = vunpack.c.l.b16 %v989
      %v1765 = vunpack.c.l.b16 %v990
      %v1766 = vunpack.c.l.b16 %v991
      %v1767 = vunpack.c.l.b16 %v992
      %v1768 = vunpack.c.l.b16 %v993
      %v1769 = vunpack.c.l.b16 %v994
      %v1770 = vunpack.c.l.b16 %v995
      %v1771 = vunpack.c.l.b16 %v996
      %v1772 = vunpack.c.l.b16 %v997
      %v1773 = vunpack.c.l.b16 %v998
      %v1774 = vunpack.c.l.b16 %v999
      %v1775 = vunpack.c.l.b16 %v1000
      %v1776 = vunpack.c.l.b16 %v1001
      %v1777 = vunpack.c.l.b16 %v1002
      %v1778 = vunpack.c.l.b16 %v1003
      %v1779 = vunpack.c.l.b16 %v1004
      %v1780 = vunpack.c.l.b16 %v1005
      %v1781 = vunpack.c.l.b16 %v1006
      %v1782 = vunpack.c.l.b16 %v1007
      %v1783 = vunpack.c.l.b16 %v1008
      %v1784 = vunpack.c.l.b16 %v1009
      %v1785 = vunpack.c.l.b16 %v1010
      %v1786 = vunpack.c.l.b16 %v1011
      %v1787 = vunpack.c.l.b16 %v1012
      %v1788 = vunpack.c.l.b16 %v1013
      %v1789 = vunpack.c.l.b16 %v1014
      %v1790 = vunpack.c.l.b16 %v1015
      %v1791 = vunpack.c.l.b16 %v1016
      %v1792 = vunpack.c.l.b16 %v1017
      %v1793 = vunpack.c.l.b16 %v1018
      %v1794 = vunpack.c.l.b16 %v1019
      %v1795 = vunpack.c.l.b16 %v1020
      %v1796 = vunpack.c.l.b16 %v1021
      %v1797 = vunpack.c.l.b16 %v1022
      %v1798 = vunpack.c.l.b16 %v1023
      %v1799 = vunpack.c.l.b16 %v1024
      %v1800 = vunpack.c.l.b16 %v1025
      %v1801 = vunpack.c.l.b16 %v1026
      %v1802 = vunpack.c.l.b16 %v1027
      %v1803 = vunpack.c.l.b16 %v1028
      %v1804 = vunpack.c.l.b16 %v1029
      %v1805 = vunpack.c.l.b16 %v1030
      %v1806 = vunpack.c.l.b16 %v1031
      %v1807 = vunpack.c.l.b16 %v1032
      %v1808 = vunpack.c.l.b16 %v1033
      %v1809 = vunpack.c.l.b16 %v1034
      %v1810 = vunpack.c.l.b16 %v1035
      %v1811 = vunpack.c.l.b16 %v1036
      %v1812 = vpack.c.b16 %v1765, %v1764
      %v1813 = vpack.c.b16 %v1767, %v1766
      %v1814 = vpack.c.b16 %v1769, %v1768
      %v1815 = vpack.c.b16 %v1771, %v1770
      %v1816 = vpack.c.b16 %v1773, %v1772
      %v1817 = vpack.c.b16 %v1775, %v1774
      %v1818 = vpack.c.b16 %v1777, %v1776
      %v1819 = vpack.c.b16 %v1779, %v1778
      %v1820 = vpack.c.b16 %v1781, %v1780
      %v1821 = vpack.c.b16 %v1783, %v1782
      %v1822 = vpack.c.b16 %v1785, %v1784
      %v1823 = vpack.c.b16 %v1787, %v1786
      %v1824 = vpack.c.b16 %v1789, %v1788
      %v1825 = vpack.c.b16 %v1791, %v1790
      %v1826 = vpack.c.b16 %v1793, %v1792
      %v1827 = vpack.c.b16 %v1795, %v1794
      %v1828 = vpack.c.b16 %v1797, %v1796
      %v1829 = vpack.c.b16 %v1799, %v1798
      %v1830 = vpack.c.b16 %v1801, %v1800
      %v1831 = vpack.c.b16 %v1803, %v1802
      %v1832 = vpack.c.b16 %v1805, %v1804
      %v1833 = vpack.c.b16 %v1807, %v1806
      %v1834 = vpack.c.b16 %v1809, %v1808
      %v1835 = vpack.c.b16 %v1811, %v1810
      %1860 = vmatprep.subr.bf16.mxu0 0
      %1861 = vmatpush1.bf16.msra.mxu0 %v1819
      %1862 = vmatprep.subr.bf16.mxu0 0
      %1863 = vmatpush1.bf16.msra.mxu0 %v1818
      %1864 = vmatprep.subr.bf16.mxu0 0
      %1865 = vmatpush1.bf16.msra.mxu0 %v1817
      %1866 = vmatprep.subr.bf16.mxu0 0
      %1867 = vmatpush1.bf16.msra.mxu0 %v1816
      %1868 = vmatprep.subr.bf16.mxu0 0
      %1869 = vmatpush1.bf16.msra.mxu0 %v1815
      %1870 = vmatprep.subr.bf16.mxu0 0
      %1871 = vmatpush1.bf16.msra.mxu0 %v1814
      %1872 = vmatprep.subr.bf16.mxu0 0
      %1873 = vmatpush1.bf16.msra.mxu0 %v1813
      %1874 = vmatprep.subr.bf16.mxu0 0
      %1875 = vmatpush1.bf16.msra.mxu0 %v1812
      %1876 = vmatprep.subr.bf16.mxu0 0
      %1877 = vmatpush2.bf16.msra.mxu0 %v1827
      %1878 = vmatprep.subr.bf16.mxu0 0
      %1879 = vmatpush2.bf16.msra.mxu0 %v1826
      %1880 = vmatprep.subr.bf16.mxu0 0
      %1881 = vmatpush2.bf16.msra.mxu0 %v1825
      %1882 = vmatprep.subr.bf16.mxu0 0
      %1883 = vmatpush2.bf16.msra.mxu0 %v1824
      %1884 = vmatprep.subr.bf16.mxu0 0
      %1885 = vmatpush2.bf16.msra.mxu0 %v1823
      %1886 = vmatprep.subr.bf16.mxu0 0
      %1887 = vmatpush2.bf16.msra.mxu0 %v1822
      %1888 = vmatprep.subr.bf16.mxu0 0
      %1889 = vmatpush2.bf16.msra.mxu0 %v1821
      %1890 = vmatprep.subr.bf16.mxu0 0
      %1891 = vmatpush2.bf16.msra.mxu0 %v1820
      %1892 = vmatprep.mubr.bf16.mxu0 %v1669
      %1893 = vmatmul.mubr.bf16.gmra.mxu0 %v1668
      %v1894 = vpop.f32.mrf.mxu0
      %v1895 = vadd.f32 %v1526, %v1894
      %v1896 = vpop.f32.mrf.mxu0
      %v1897 = vpop.f32.mrf.mxu0
      %v1898 = vadd.f32 %v1529, %v1897
      %v1899 = vpop.f32.mrf.mxu0
      %1900 = vmatprep.mubr.bf16.mxu0 %v1672
      %1901 = vmatmul.mubr.bf16.gmra.mxu0 %v1671
      %v1902 = vpop.f32.mrf.mxu0
      %v1903 = vadd.f32 %v1534, %v1902
      %v1904 = vpop.f32.mrf.mxu0
      %v1905 = vpop.f32.mrf.mxu0
      %v1906 = vadd.f32 %v1537, %v1905
      %v1907 = vpop.f32.mrf.mxu0
      %1908 = vmatprep.mubr.bf16.mxu0 %v1675
      %1909 = vmatmul.mubr.bf16.gmra.mxu0 %v1674
      %v1910 = vpop.f32.mrf.mxu0
      %v1911 = vadd.f32 %v1542, %v1910
      %v1912 = vpop.f32.mrf.mxu0
      %v1913 = vpop.f32.mrf.mxu0
      %v1914 = vadd.f32 %v1545, %v1913
      %v1915 = vpop.f32.mrf.mxu0
      %1916 = vmatprep.mubr.bf16.mxu0 %v1678
      %1917 = vmatmul.mubr.bf16.gmra.mxu0 %v1677
      %v1918 = vpop.f32.mrf.mxu0
      %v1919 = vadd.f32 %v1550, %v1918
      %v1920 = vpop.f32.mrf.mxu0
      %v1921 = vpop.f32.mrf.mxu0
      %v1922 = vadd.f32 %v1553, %v1921
      %v1923 = vpop.f32.mrf.mxu0
      %1924 = vmatprep.mubr.bf16.mxu0 %v1681
      %1925 = vmatmul.mubr.bf16.gmra.mxu0 %v1680
      %v1926 = vpop.f32.mrf.mxu0
      %v1927 = vadd.f32 %v1558, %v1926
      %v1928 = vpop.f32.mrf.mxu0
      %v1929 = vpop.f32.mrf.mxu0
      %v1930 = vadd.f32 %v1561, %v1929
      %v1931 = vpop.f32.mrf.mxu0
      %1932 = vmatprep.mubr.bf16.mxu0 %v1684
      %1933 = vmatmul.mubr.bf16.gmra.mxu0 %v1683
      %v1934 = vpop.f32.mrf.mxu0
      %v1935 = vadd.f32 %v1566, %v1934
      %v1936 = vpop.f32.mrf.mxu0
      %v1937 = vpop.f32.mrf.mxu0
      %v1938 = vadd.f32 %v1569, %v1937
      %v1939 = vpop.f32.mrf.mxu0
      %1940 = vmatprep.mubr.bf16.mxu0 %v1687
      %1941 = vmatmul.mubr.bf16.gmra.mxu0 %v1686
      %v1942 = vpop.f32.mrf.mxu0
      %v1943 = vadd.f32 %v1574, %v1942
      %v1944 = vpop.f32.mrf.mxu0
      %v1945 = vpop.f32.mrf.mxu0
      %v1946 = vadd.f32 %v1577, %v1945
      %v1947 = vpop.f32.mrf.mxu0
      %1948 = vmatprep.mubr.bf16.mxu0 %v1690
      %1949 = vmatmul.mubr.bf16.gmra.mxu0 %v1689
      %v1950 = vpop.f32.mrf.mxu0
      %v1951 = vadd.f32 %v1582, %v1950
      %v1952 = vpop.f32.mrf.mxu0
      %v1953 = vpop.f32.mrf.mxu0
      %v1954 = vadd.f32 %v1585, %v1953
      %v1955 = vpop.f32.mrf.mxu0
      %1956 = vdwg.mxu0
      %1957 = vmatprep.subr.bf16.mxu0 0
      %1958 = vmatpush1.bf16.msra.mxu0 %v1835
      %1959 = vmatprep.subr.bf16.mxu0 0
      %1960 = vmatpush1.bf16.msra.mxu0 %v1834
      %1961 = vmatprep.subr.bf16.mxu0 0
      %1962 = vmatpush1.bf16.msra.mxu0 %v1833
      %1963 = vmatprep.subr.bf16.mxu0 0
      %1964 = vmatpush1.bf16.msra.mxu0 %v1832
      %1965 = vmatprep.subr.bf16.mxu0 0
      %1966 = vmatpush1.bf16.msra.mxu0 %v1831
      %1967 = vmatprep.subr.bf16.mxu0 0
      %1968 = vmatpush1.bf16.msra.mxu0 %v1830
      %1969 = vmatprep.subr.bf16.mxu0 0
      %1970 = vmatpush1.bf16.msra.mxu0 %v1829
      %1971 = vmatprep.subr.bf16.mxu0 0
      %1972 = vmatpush1.bf16.msra.mxu0 %v1828
      %1973 = vmatprep.subr.bf16.mxu0 0
      %1974 = vmatpush2.bf16.msra.mxu0 0
      %1975 = vmatprep.subr.bf16.mxu0 0
      %1976 = vmatpush2.bf16.msra.mxu0 0
      %1977 = vmatprep.subr.bf16.mxu0 0
      %1978 = vmatpush2.bf16.msra.mxu0 0
      %1979 = vmatprep.subr.bf16.mxu0 0
      %1980 = vmatpush2.bf16.msra.mxu0 0
      %1981 = vmatprep.subr.bf16.mxu0 0
      %1982 = vmatpush2.bf16.msra.mxu0 0
      %1983 = vmatprep.subr.bf16.mxu0 0
      %1984 = vmatpush2.bf16.msra.mxu0 0
      %1985 = vmatprep.subr.bf16.mxu0 0
      %1986 = vmatpush2.bf16.msra.mxu0 0
      %1987 = vmatprep.subr.bf16.mxu0 0
      %1988 = vmatpush2.bf16.msra.mxu0 0
      %1989 = vmatprep.mubr.bf16.mxu0 0
      %1990 = vmatmul.mubr.bf16.gmra.mxu0 %v1670
      %v1991 = vpop.f32.mrf.mxu0
      %v1992 = vadd.f32 %v1895, %v1991
      %v1993 = vpop.f32.mrf.mxu0
      %v1994 = vpop.f32.mrf.mxu0
      %v1995 = vadd.f32 %v1898, %v1994
      %v1996 = vpop.f32.mrf.mxu0
      %1997 = vmatprep.mubr.bf16.mxu0 0
      %1998 = vmatmul.mubr.bf16.gmra.mxu0 %v1673
      %v1999 = vpop.f32.mrf.mxu0
      %v2000 = vadd.f32 %v1903, %v1999
      %v2001 = vpop.f32.mrf.mxu0
      %v2002 = vpop.f32.mrf.mxu0
      %v2003 = vadd.f32 %v1906, %v2002
      %v2004 = vpop.f32.mrf.mxu0
      %2005 = vmatprep.mubr.bf16.mxu0 0
      %2006 = vmatmul.mubr.bf16.gmra.mxu0 %v1676
      %v2007 = vpop.f32.mrf.mxu0
      %v2008 = vadd.f32 %v1911, %v2007
      %v2009 = vpop.f32.mrf.mxu0
      %v2010 = vpop.f32.mrf.mxu0
      %v2011 = vadd.f32 %v1914, %v2010
      %v2012 = vpop.f32.mrf.mxu0
      %2013 = vmatprep.mubr.bf16.mxu0 0
      %2014 = vmatmul.mubr.bf16.gmra.mxu0 %v1679
      %v2015 = vpop.f32.mrf.mxu0
      %v2016 = vadd.f32 %v1919, %v2015
      %v2017 = vpop.f32.mrf.mxu0
      %v2018 = vpop.f32.mrf.mxu0
      %v2019 = vadd.f32 %v1922, %v2018
      %v2020 = vpop.f32.mrf.mxu0
      %2021 = vmatprep.mubr.bf16.mxu0 0
      %2022 = vmatmul.mubr.bf16.gmra.mxu0 %v1682
      %v2023 = vpop.f32.mrf.mxu0
      %v2024 = vadd.f32 %v1927, %v2023
      %v2025 = vpop.f32.mrf.mxu0
      %v2026 = vpop.f32.mrf.mxu0
      %v2027 = vadd.f32 %v1930, %v2026
      %v2028 = vpop.f32.mrf.mxu0
      %2029 = vmatprep.mubr.bf16.mxu0 0
      %2030 = vmatmul.mubr.bf16.gmra.mxu0 %v1685
      %v2031 = vpop.f32.mrf.mxu0
      %v2032 = vadd.f32 %v1935, %v2031
      %v2033 = vpop.f32.mrf.mxu0
      %v2034 = vpop.f32.mrf.mxu0
      %v2035 = vadd.f32 %v1938, %v2034
      %v2036 = vpop.f32.mrf.mxu0
      %2037 = vmatprep.mubr.bf16.mxu0 0
      %2038 = vmatmul.mubr.bf16.gmra.mxu0 %v1688
      %v2039 = vpop.f32.mrf.mxu0
      %v2040 = vadd.f32 %v1943, %v2039
      %v2041 = vpop.f32.mrf.mxu0
      %v2042 = vpop.f32.mrf.mxu0
      %v2043 = vadd.f32 %v1946, %v2042
      %v2044 = vpop.f32.mrf.mxu0
      %2045 = vmatprep.mubr.bf16.mxu0 0
      %2046 = vmatmul.mubr.bf16.gmra.mxu0 %v1691
      %v2047 = vpop.f32.mrf.mxu0
      %v2048 = vadd.f32 %v1951, %v2047
      %v2049 = vpop.f32.mrf.mxu0
      %v2050 = vpop.f32.mrf.mxu0
      %v2051 = vadd.f32 %v1954, %v2050
      %v2052 = vpop.f32.mrf.mxu0
      %2053 = vdwg.mxu0
      %s2054 = sadd.s32 %s953, 2
      %s2055 = smul.u32 %s2054, 6
      %s2056 = smul.addr %s2055, 4
      %s2057 = scalar_lea.vmem [#allocation2], %s2056
      %v2058 = vld [vmem:[%s2057] sm:$0xff]
      %v2059 = vld [vmem:[%s2057 + $0x8] sm:$0xf]
      %v2060 = vld [vmem:[%s2057 + $0xc] sm:$0xff]
      %v2061 = vld [vmem:[%s2057 + $0x14] sm:$0xf]
      %v2062 = vld [vmem:[%s2057 + $0x18] sm:$0xff]
      %v2063 = vld [vmem:[%s2057 + $0x20] sm:$0xf]
      %v2064 = vld [vmem:[%s2057 + $0x24] sm:$0xff]
      %v2065 = vld [vmem:[%s2057 + $0x2c] sm:$0xf]
      %v2066 = vld [vmem:[%s2057 + $0x30] sm:$0xff]
      %v2067 = vld [vmem:[%s2057 + $0x38] sm:$0xf]
      %v2068 = vld [vmem:[%s2057 + $0x3c] sm:$0xff]
      %v2069 = vld [vmem:[%s2057 + $0x44] sm:$0xf]
      %v2070 = vld [vmem:[%s2057 + $0x48] sm:$0xff]
      %v2071 = vld [vmem:[%s2057 + $0x50] sm:$0xf]
      %v2072 = vld [vmem:[%s2057 + $0x54] sm:$0xff]
      %v2073 = vld [vmem:[%s2057 + $0x5c] sm:$0xf]
      %v2074 = vld [vmem:[%s2057 + $0x60] sm:$0xff]
      %v2075 = vld [vmem:[%s2057 + $0x68] sm:$0xf]
      %v2076 = vld [vmem:[%s2057 + $0x6c] sm:$0xff]
      %v2077 = vld [vmem:[%s2057 + $0x74] sm:$0xf]
      %v2078 = vld [vmem:[%s2057 + $0x78] sm:$0xff]
      %v2079 = vld [vmem:[%s2057 + $0x80] sm:$0xf]
      %v2080 = vld [vmem:[%s2057 + $0x84] sm:$0xff]
      %v2081 = vld [vmem:[%s2057 + $0x8c] sm:$0xf]
      %v2082 = vld [vmem:[%s2057 + $0x90] sm:$0xff]
      %v2083 = vld [vmem:[%s2057 + $0x98] sm:$0xf]
      %v2084 = vld [vmem:[%s2057 + $0x9c] sm:$0xff]
      %v2085 = vld [vmem:[%s2057 + $0xa4] sm:$0xf]
      %v2086 = vld [vmem:[%s2057 + $0xa8] sm:$0xff]
      %v2087 = vld [vmem:[%s2057 + $0xb0] sm:$0xf]
      %v2088 = vld [vmem:[%s2057 + $0xb4] sm:$0xff]
      %v2089 = vld [vmem:[%s2057 + $0xbc] sm:$0xf]
      %s2090 = scalar_lea.vmem %s1, 384
      %v2091 = vld [vmem:[%s2090] sm:$0xf]
      %v2092 = vld [vmem:[%s2090 + $0x4] sm:$0xf]
      %v2093 = vld [vmem:[%s2090 + $0x8] sm:$0xf]
      %v2094 = vld [vmem:[%s2090 + $0xc] sm:$0xf]
      %v2095 = vld [vmem:[%s2090 + $0x10] sm:$0xf]
      %v2096 = vld [vmem:[%s2090 + $0x14] sm:$0xf]
      %v2097 = vld [vmem:[%s2090 + $0x18] sm:$0xf]
      %v2098 = vld [vmem:[%s2090 + $0x1c] sm:$0xf]
      %v2099 = vld [vmem:[%s2090 + $0x20] sm:$0xf]
      %v2100 = vld [vmem:[%s2090 + $0x24] sm:$0xf]
      %v2101 = vld [vmem:[%s2090 + $0x28] sm:$0xf]
      %v2102 = vld [vmem:[%s2090 + $0x2c] sm:$0xf]
      %v2103 = vld [vmem:[%s2090 + $0x30] sm:$0xf]
      %v2104 = vld [vmem:[%s2090 + $0x34] sm:$0xf]
      %v2105 = vld [vmem:[%s2090 + $0x38] sm:$0xf]
      %v2106 = vld [vmem:[%s2090 + $0x3c] sm:$0xf]
      %v2107 = vld [vmem:[%s2090 + $0x40] sm:$0xf]
      %v2108 = vld [vmem:[%s2090 + $0x44] sm:$0xf]
      %v2109 = vld [vmem:[%s2090 + $0x48] sm:$0xf]
      %v2110 = vld [vmem:[%s2090 + $0x4c] sm:$0xf]
      %v2111 = vld [vmem:[%s2090 + $0x50] sm:$0xf]
      %v2112 = vld [vmem:[%s2090 + $0x54] sm:$0xf]
      %v2113 = vld [vmem:[%s2090 + $0x58] sm:$0xf]
      %v2114 = vld [vmem:[%s2090 + $0x5c] sm:$0xf]
      %v2115 = vld [vmem:[%s2090 + $0x60] sm:$0xf]
      %v2116 = vld [vmem:[%s2090 + $0x64] sm:$0xf]
      %v2117 = vld [vmem:[%s2090 + $0x68] sm:$0xf]
      %v2118 = vld [vmem:[%s2090 + $0x6c] sm:$0xf]
      %v2119 = vld [vmem:[%s2090 + $0x70] sm:$0xf]
      %v2120 = vld [vmem:[%s2090 + $0x74] sm:$0xf]
      %v2121 = vld [vmem:[%s2090 + $0x78] sm:$0xf]
      %v2122 = vld [vmem:[%s2090 + $0x7c] sm:$0xf]
      %v2123 = vld [vmem:[%s2090 + $0x80] sm:$0xf]
      %v2124 = vld [vmem:[%s2090 + $0x84] sm:$0xf]
      %v2125 = vld [vmem:[%s2090 + $0x88] sm:$0xf]
      %v2126 = vld [vmem:[%s2090 + $0x8c] sm:$0xf]
      %v2127 = vld [vmem:[%s2090 + $0x90] sm:$0xf]
      %v2128 = vld [vmem:[%s2090 + $0x94] sm:$0xf]
      %v2129 = vld [vmem:[%s2090 + $0x98] sm:$0xf]
      %v2130 = vld [vmem:[%s2090 + $0x9c] sm:$0xf]
      %v2131 = vld [vmem:[%s2090 + $0xa0] sm:$0xf]
      %v2132 = vld [vmem:[%s2090 + $0xa4] sm:$0xf]
      %v2133 = vld [vmem:[%s2090 + $0xa8] sm:$0xf]
      %v2134 = vld [vmem:[%s2090 + $0xac] sm:$0xf]
      %v2135 = vld [vmem:[%s2090 + $0xb0] sm:$0xf]
      %v2136 = vld [vmem:[%s2090 + $0xb4] sm:$0xf]
      %v2137 = vld [vmem:[%s2090 + $0xb8] sm:$0xf]
      %v2138 = vld [vmem:[%s2090 + $0xbc] sm:$0xf]
      %v2171 = vunpack.c.l.b16 %v2058
      %v2172 = vunpack.c.h.b16 %v2058
      %v2173 = vunpack.c.l.b16 %v2059
      %v2174 = vunpack.c.l.b16 %v2060
      %v2175 = vunpack.c.h.b16 %v2060
      %v2176 = vunpack.c.l.b16 %v2061
      %v2177 = vunpack.c.l.b16 %v2062
      %v2178 = vunpack.c.h.b16 %v2062
      %v2179 = vunpack.c.l.b16 %v2063
      %v2180 = vunpack.c.l.b16 %v2064
      %v2181 = vunpack.c.h.b16 %v2064
      %v2182 = vunpack.c.l.b16 %v2065
      %v2183 = vunpack.c.l.b16 %v2066
      %v2184 = vunpack.c.h.b16 %v2066
      %v2185 = vunpack.c.l.b16 %v2067
      %v2186 = vunpack.c.l.b16 %v2068
      %v2187 = vunpack.c.h.b16 %v2068
      %v2188 = vunpack.c.l.b16 %v2069
      %v2189 = vunpack.c.l.b16 %v2070
      %v2190 = vunpack.c.h.b16 %v2070
      %v2191 = vunpack.c.l.b16 %v2071
      %v2192 = vunpack.c.l.b16 %v2072
      %v2193 = vunpack.c.h.b16 %v2072
      %v2194 = vunpack.c.l.b16 %v2073
      %v2195 = vunpack.c.l.b16 %v2074
      %v2196 = vunpack.c.h.b16 %v2074
      %v2197 = vunpack.c.l.b16 %v2075
      %v2198 = vunpack.c.l.b16 %v2076
      %v2199 = vunpack.c.h.b16 %v2076
      %v2200 = vunpack.c.l.b16 %v2077
      %v2201 = vunpack.c.l.b16 %v2078
      %v2202 = vunpack.c.h.b16 %v2078
      %v2203 = vunpack.c.l.b16 %v2079
      %v2204 = vunpack.c.l.b16 %v2080
      %v2205 = vunpack.c.h.b16 %v2080
      %v2206 = vunpack.c.l.b16 %v2081
      %v2207 = vunpack.c.l.b16 %v2082
      %v2208 = vunpack.c.h.b16 %v2082
      %v2209 = vunpack.c.l.b16 %v2083
      %v2210 = vunpack.c.l.b16 %v2084
      %v2211 = vunpack.c.h.b16 %v2084
      %v2212 = vunpack.c.l.b16 %v2085
      %v2213 = vunpack.c.l.b16 %v2086
      %v2214 = vunpack.c.h.b16 %v2086
      %v2215 = vunpack.c.l.b16 %v2087
      %v2216 = vunpack.c.l.b16 %v2088
      %v2217 = vunpack.c.h.b16 %v2088
      %v2218 = vunpack.c.l.b16 %v2089
      %v2219 = vpack.c.b16 %v2174, %v2171
      %v2220 = vpack.c.b16 %v2175, %v2172
      %v2221 = vpack.c.b16 %v2176, %v2173
      %v2222 = vpack.c.b16 %v2180, %v2177
      %v2223 = vpack.c.b16 %v2181, %v2178
      %v2224 = vpack.c.b16 %v2182, %v2179
      %v2225 = vpack.c.b16 %v2186, %v2183
      %v2226 = vpack.c.b16 %v2187, %v2184
      %v2227 = vpack.c.b16 %v2188, %v2185
      %v2228 = vpack.c.b16 %v2192, %v2189
      %v2229 = vpack.c.b16 %v2193, %v2190
      %v2230 = vpack.c.b16 %v2194, %v2191
      %v2231 = vpack.c.b16 %v2198, %v2195
      %v2232 = vpack.c.b16 %v2199, %v2196
      %v2233 = vpack.c.b16 %v2200, %v2197
      %v2234 = vpack.c.b16 %v2204, %v2201
      %v2235 = vpack.c.b16 %v2205, %v2202
      %v2236 = vpack.c.b16 %v2206, %v2203
      %v2237 = vpack.c.b16 %v2210, %v2207
      %v2238 = vpack.c.b16 %v2211, %v2208
      %v2239 = vpack.c.b16 %v2212, %v2209
      %v2240 = vpack.c.b16 %v2216, %v2213
      %v2241 = vpack.c.b16 %v2217, %v2214
      %v2242 = vpack.c.b16 %v2218, %v2215
      %v2315 = vunpack.c.l.b16 %v2091
      %v2316 = vunpack.c.l.b16 %v2092
      %v2317 = vunpack.c.l.b16 %v2093
      %v2318 = vunpack.c.l.b16 %v2094
      %v2319 = vunpack.c.l.b16 %v2095
      %v2320 = vunpack.c.l.b16 %v2096
      %v2321 = vunpack.c.l.b16 %v2097
      %v2322 = vunpack.c.l.b16 %v2098
      %v2323 = vunpack.c.l.b16 %v2099
      %v2324 = vunpack.c.l.b16 %v2100
      %v2325 = vunpack.c.l.b16 %v2101
      %v2326 = vunpack.c.l.b16 %v2102
      %v2327 = vunpack.c.l.b16 %v2103
      %v2328 = vunpack.c.l.b16 %v2104
      %v2329 = vunpack.c.l.b16 %v2105
      %v2330 = vunpack.c.l.b16 %v2106
      %v2331 = vunpack.c.l.b16 %v2107
      %v2332 = vunpack.c.l.b16 %v2108
      %v2333 = vunpack.c.l.b16 %v2109
      %v2334 = vunpack.c.l.b16 %v2110
      %v2335 = vunpack.c.l.b16 %v2111
      %v2336 = vunpack.c.l.b16 %v2112
      %v2337 = vunpack.c.l.b16 %v2113
      %v2338 = vunpack.c.l.b16 %v2114
      %v2339 = vunpack.c.l.b16 %v2115
      %v2340 = vunpack.c.l.b16 %v2116
      %v2341 = vunpack.c.l.b16 %v2117
      %v2342 = vunpack.c.l.b16 %v2118
      %v2343 = vunpack.c.l.b16 %v2119
      %v2344 = vunpack.c.l.b16 %v2120
      %v2345 = vunpack.c.l.b16 %v2121
      %v2346 = vunpack.c.l.b16 %v2122
      %v2347 = vunpack.c.l.b16 %v2123
      %v2348 = vunpack.c.l.b16 %v2124
      %v2349 = vunpack.c.l.b16 %v2125
      %v2350 = vunpack.c.l.b16 %v2126
      %v2351 = vunpack.c.l.b16 %v2127
      %v2352 = vunpack.c.l.b16 %v2128
      %v2353 = vunpack.c.l.b16 %v2129
      %v2354 = vunpack.c.l.b16 %v2130
      %v2355 = vunpack.c.l.b16 %v2131
      %v2356 = vunpack.c.l.b16 %v2132
      %v2357 = vunpack.c.l.b16 %v2133
      %v2358 = vunpack.c.l.b16 %v2134
      %v2359 = vunpack.c.l.b16 %v2135
      %v2360 = vunpack.c.l.b16 %v2136
      %v2361 = vunpack.c.l.b16 %v2137
      %v2362 = vunpack.c.l.b16 %v2138
      %v2363 = vpack.c.b16 %v2316, %v2315
      %v2364 = vpack.c.b16 %v2318, %v2317
      %v2365 = vpack.c.b16 %v2320, %v2319
      %v2366 = vpack.c.b16 %v2322, %v2321
      %v2367 = vpack.c.b16 %v2324, %v2323
      %v2368 = vpack.c.b16 %v2326, %v2325
      %v2369 = vpack.c.b16 %v2328, %v2327
      %v2370 = vpack.c.b16 %v2330, %v2329
      %v2371 = vpack.c.b16 %v2332, %v2331
      %v2372 = vpack.c.b16 %v2334, %v2333
      %v2373 = vpack.c.b16 %v2336, %v2335
      %v2374 = vpack.c.b16 %v2338, %v2337
      %v2375 = vpack.c.b16 %v2340, %v2339
      %v2376 = vpack.c.b16 %v2342, %v2341
      %v2377 = vpack.c.b16 %v2344, %v2343
      %v2378 = vpack.c.b16 %v2346, %v2345
      %v2379 = vpack.c.b16 %v2348, %v2347
      %v2380 = vpack.c.b16 %v2350, %v2349
      %v2381 = vpack.c.b16 %v2352, %v2351
      %v2382 = vpack.c.b16 %v2354, %v2353
      %v2383 = vpack.c.b16 %v2356, %v2355
      %v2384 = vpack.c.b16 %v2358, %v2357
      %v2385 = vpack.c.b16 %v2360, %v2359
      %v2386 = vpack.c.b16 %v2362, %v2361
      %2411 = vmatprep.subr.bf16.mxu0 0
      %2412 = vmatpush1.bf16.msra.mxu0 %v2370
      %2413 = vmatprep.subr.bf16.mxu0 0
      %2414 = vmatpush1.bf16.msra.mxu0 %v2369
      %2415 = vmatprep.subr.bf16.mxu0 0
      %2416 = vmatpush1.bf16.msra.mxu0 %v2368
      %2417 = vmatprep.subr.bf16.mxu0 0
      %2418 = vmatpush1.bf16.msra.mxu0 %v2367
      %2419 = vmatprep.subr.bf16.mxu0 0
      %2420 = vmatpush1.bf16.msra.mxu0 %v2366
      %2421 = vmatprep.subr.bf16.mxu0 0
      %2422 = vmatpush1.bf16.msra.mxu0 %v2365
      %2423 = vmatprep.subr.bf16.mxu0 0
      %2424 = vmatpush1.bf16.msra.mxu0 %v2364
      %2425 = vmatprep.subr.bf16.mxu0 0
      %2426 = vmatpush1.bf16.msra.mxu0 %v2363
      %2427 = vmatprep.subr.bf16.mxu0 0
      %2428 = vmatpush2.bf16.msra.mxu0 %v2378
      %2429 = vmatprep.subr.bf16.mxu0 0
      %2430 = vmatpush2.bf16.msra.mxu0 %v2377
      %2431 = vmatprep.subr.bf16.mxu0 0
      %2432 = vmatpush2.bf16.msra.mxu0 %v2376
      %2433 = vmatprep.subr.bf16.mxu0 0
      %2434 = vmatpush2.bf16.msra.mxu0 %v2375
      %2435 = vmatprep.subr.bf16.mxu0 0
      %2436 = vmatpush2.bf16.msra.mxu0 %v2374
      %2437 = vmatprep.subr.bf16.mxu0 0
      %2438 = vmatpush2.bf16.msra.mxu0 %v2373
      %2439 = vmatprep.subr.bf16.mxu0 0
      %2440 = vmatpush2.bf16.msra.mxu0 %v2372
      %2441 = vmatprep.subr.bf16.mxu0 0
      %2442 = vmatpush2.bf16.msra.mxu0 %v2371
      %2443 = vmatprep.mubr.bf16.mxu0 %v2220
      %2444 = vmatmul.mubr.bf16.gmra.mxu0 %v2219
      %v2445 = vpop.f32.mrf.mxu0
      %v2446 = vadd.f32 0.0, %v2445
      %v2447 = vpop.f32.mrf.mxu0
      %v2448 = vpop.f32.mrf.mxu0
      %v2449 = vadd.f32 0.0, %v2448
      %v2450 = vpop.f32.mrf.mxu0
      %2451 = vmatprep.mubr.bf16.mxu0 %v2223
      %2452 = vmatmul.mubr.bf16.gmra.mxu0 %v2222
      %v2453 = vpop.f32.mrf.mxu0
      %v2454 = vadd.f32 0.0, %v2453
      %v2455 = vpop.f32.mrf.mxu0
      %v2456 = vpop.f32.mrf.mxu0
      %v2457 = vadd.f32 0.0, %v2456
      %v2458 = vpop.f32.mrf.mxu0
      %2459 = vmatprep.mubr.bf16.mxu0 %v2226
      %2460 = vmatmul.mubr.bf16.gmra.mxu0 %v2225
      %v2461 = vpop.f32.mrf.mxu0
      %v2462 = vadd.f32 0.0, %v2461
      %v2463 = vpop.f32.mrf.mxu0
      %v2464 = vpop.f32.mrf.mxu0
      %v2465 = vadd.f32 0.0, %v2464
      %v2466 = vpop.f32.mrf.mxu0
      %2467 = vmatprep.mubr.bf16.mxu0 %v2229
      %2468 = vmatmul.mubr.bf16.gmra.mxu0 %v2228
      %v2469 = vpop.f32.mrf.mxu0
      %v2470 = vadd.f32 0.0, %v2469
      %v2471 = vpop.f32.mrf.mxu0
      %v2472 = vpop.f32.mrf.mxu0
      %v2473 = vadd.f32 0.0, %v2472
      %v2474 = vpop.f32.mrf.mxu0
      %2475 = vmatprep.mubr.bf16.mxu0 %v2232
      %2476 = vmatmul.mubr.bf16.gmra.mxu0 %v2231
      %v2477 = vpop.f32.mrf.mxu0
      %v2478 = vadd.f32 0.0, %v2477
      %v2479 = vpop.f32.mrf.mxu0
      %v2480 = vpop.f32.mrf.mxu0
      %v2481 = vadd.f32 0.0, %v2480
      %v2482 = vpop.f32.mrf.mxu0
      %2483 = vmatprep.mubr.bf16.mxu0 %v2235
      %2484 = vmatmul.mubr.bf16.gmra.mxu0 %v2234
      %v2485 = vpop.f32.mrf.mxu0
      %v2486 = vadd.f32 0.0, %v2485
      %v2487 = vpop.f32.mrf.mxu0
      %v2488 = vpop.f32.mrf.mxu0
      %v2489 = vadd.f32 0.0, %v2488
      %v2490 = vpop.f32.mrf.mxu0
      %2491 = vmatprep.mubr.bf16.mxu0 %v2238
      %2492 = vmatmul.mubr.bf16.gmra.mxu0 %v2237
      %v2493 = vpop.f32.mrf.mxu0
      %v2494 = vadd.f32 0.0, %v2493
      %v2495 = vpop.f32.mrf.mxu0
      %v2496 = vpop.f32.mrf.mxu0
      %v2497 = vadd.f32 0.0, %v2496
      %v2498 = vpop.f32.mrf.mxu0
      %2499 = vmatprep.mubr.bf16.mxu0 %v2241
      %2500 = vmatmul.mubr.bf16.gmra.mxu0 %v2240
      %v2501 = vpop.f32.mrf.mxu0
      %v2502 = vadd.f32 0.0, %v2501
      %v2503 = vpop.f32.mrf.mxu0
      %v2504 = vpop.f32.mrf.mxu0
      %v2505 = vadd.f32 0.0, %v2504
      %v2506 = vpop.f32.mrf.mxu0
      %2507 = vdwg.mxu0
      %2508 = vmatprep.subr.bf16.mxu0 0
      %2509 = vmatpush1.bf16.msra.mxu0 %v2386
      %2510 = vmatprep.subr.bf16.mxu0 0
      %2511 = vmatpush1.bf16.msra.mxu0 %v2385
      %2512 = vmatprep.subr.bf16.mxu0 0
      %2513 = vmatpush1.bf16.msra.mxu0 %v2384
      %2514 = vmatprep.subr.bf16.mxu0 0
      %2515 = vmatpush1.bf16.msra.mxu0 %v2383
      %2516 = vmatprep.subr.bf16.mxu0 0
      %2517 = vmatpush1.bf16.msra.mxu0 %v2382
      %2518 = vmatprep.subr.bf16.mxu0 0
      %2519 = vmatpush1.bf16.msra.mxu0 %v2381
      %2520 = vmatprep.subr.bf16.mxu0 0
      %2521 = vmatpush1.bf16.msra.mxu0 %v2380
      %2522 = vmatprep.subr.bf16.mxu0 0
      %2523 = vmatpush1.bf16.msra.mxu0 %v2379
      %2524 = vmatprep.subr.bf16.mxu0 0
      %2525 = vmatpush2.bf16.msra.mxu0 0
      %2526 = vmatprep.subr.bf16.mxu0 0
      %2527 = vmatpush2.bf16.msra.mxu0 0
      %2528 = vmatprep.subr.bf16.mxu0 0
      %2529 = vmatpush2.bf16.msra.mxu0 0
      %2530 = vmatprep.subr.bf16.mxu0 0
      %2531 = vmatpush2.bf16.msra.mxu0 0
      %2532 = vmatprep.subr.bf16.mxu0 0
      %2533 = vmatpush2.bf16.msra.mxu0 0
      %2534 = vmatprep.subr.bf16.mxu0 0
      %2535 = vmatpush2.bf16.msra.mxu0 0
      %2536 = vmatprep.subr.bf16.mxu0 0
      %2537 = vmatpush2.bf16.msra.mxu0 0
      %2538 = vmatprep.subr.bf16.mxu0 0
      %2539 = vmatpush2.bf16.msra.mxu0 0
      %2540 = vmatprep.mubr.bf16.mxu0 0
      %2541 = vmatmul.mubr.bf16.gmra.mxu0 %v2221
      %v2542 = vpop.f32.mrf.mxu0
      %v2543 = vadd.f32 %v2446, %v2542
      %v2544 = vpop.f32.mrf.mxu0
      %v2545 = vpop.f32.mrf.mxu0
      %v2546 = vadd.f32 %v2449, %v2545
      %v2547 = vpop.f32.mrf.mxu0
      %2548 = vmatprep.mubr.bf16.mxu0 0
      %2549 = vmatmul.mubr.bf16.gmra.mxu0 %v2224
      %v2550 = vpop.f32.mrf.mxu0
      %v2551 = vadd.f32 %v2454, %v2550
      %v2552 = vpop.f32.mrf.mxu0
      %v2553 = vpop.f32.mrf.mxu0
      %v2554 = vadd.f32 %v2457, %v2553
      %v2555 = vpop.f32.mrf.mxu0
      %2556 = vmatprep.mubr.bf16.mxu0 0
      %2557 = vmatmul.mubr.bf16.gmra.mxu0 %v2227
      %v2558 = vpop.f32.mrf.mxu0
      %v2559 = vadd.f32 %v2462, %v2558
      %v2560 = vpop.f32.mrf.mxu0
      %v2561 = vpop.f32.mrf.mxu0
      %v2562 = vadd.f32 %v2465, %v2561
      %v2563 = vpop.f32.mrf.mxu0
      %2564 = vmatprep.mubr.bf16.mxu0 0
      %2565 = vmatmul.mubr.bf16.gmra.mxu0 %v2230
      %v2566 = vpop.f32.mrf.mxu0
      %v2567 = vadd.f32 %v2470, %v2566
      %v2568 = vpop.f32.mrf.mxu0
      %v2569 = vpop.f32.mrf.mxu0
      %v2570 = vadd.f32 %v2473, %v2569
      %v2571 = vpop.f32.mrf.mxu0
      %2572 = vmatprep.mubr.bf16.mxu0 0
      %2573 = vmatmul.mubr.bf16.gmra.mxu0 %v2233
      %v2574 = vpop.f32.mrf.mxu0
      %v2575 = vadd.f32 %v2478, %v2574
      %v2576 = vpop.f32.mrf.mxu0
      %v2577 = vpop.f32.mrf.mxu0
      %v2578 = vadd.f32 %v2481, %v2577
      %v2579 = vpop.f32.mrf.mxu0
      %2580 = vmatprep.mubr.bf16.mxu0 0
      %2581 = vmatmul.mubr.bf16.gmra.mxu0 %v2236
      %v2582 = vpop.f32.mrf.mxu0
      %v2583 = vadd.f32 %v2486, %v2582
      %v2584 = vpop.f32.mrf.mxu0
      %v2585 = vpop.f32.mrf.mxu0
      %v2586 = vadd.f32 %v2489, %v2585
      %v2587 = vpop.f32.mrf.mxu0
      %2588 = vmatprep.mubr.bf16.mxu0 0
      %2589 = vmatmul.mubr.bf16.gmra.mxu0 %v2239
      %v2590 = vpop.f32.mrf.mxu0
      %v2591 = vadd.f32 %v2494, %v2590
      %v2592 = vpop.f32.mrf.mxu0
      %v2593 = vpop.f32.mrf.mxu0
      %v2594 = vadd.f32 %v2497, %v2593
      %v2595 = vpop.f32.mrf.mxu0
      %2596 = vmatprep.mubr.bf16.mxu0 0
      %2597 = vmatmul.mubr.bf16.gmra.mxu0 %v2242
      %v2598 = vpop.f32.mrf.mxu0
      %v2599 = vadd.f32 %v2502, %v2598
      %v2600 = vpop.f32.mrf.mxu0
      %v2601 = vpop.f32.mrf.mxu0
      %v2602 = vadd.f32 %v2505, %v2601
      %v2603 = vpop.f32.mrf.mxu0
      %2604 = vdwg.mxu0
      %v2605 = vadd.f32 %v1992, %v2543
      %v2606 = vadd.f32 %v1995, %v2546
      %v2607 = vadd.f32 %v2000, %v2551
      %v2608 = vadd.f32 %v2003, %v2554
      %v2609 = vadd.f32 %v2008, %v2559
      %v2610 = vadd.f32 %v2011, %v2562
      %v2611 = vadd.f32 %v2016, %v2567
      %v2612 = vadd.f32 %v2019, %v2570
      %v2613 = vadd.f32 %v2024, %v2575
      %v2614 = vadd.f32 %v2027, %v2578
      %v2615 = vadd.f32 %v2032, %v2583
      %v2616 = vadd.f32 %v2035, %v2586
      %v2617 = vadd.f32 %v2040, %v2591
      %v2618 = vadd.f32 %v2043, %v2594
      %v2619 = vadd.f32 %v2048, %v2599
      %v2620 = vadd.f32 %v2051, %v2602
      %v2621 = vpack.c.bf16 %v2606, %v2605
      %v2622 = vpack.c.bf16 %v2608, %v2607
      %v2623 = vpack.c.bf16 %v2610, %v2609
      %v2624 = vpack.c.bf16 %v2612, %v2611
      %v2625 = vpack.c.bf16 %v2614, %v2613
      %v2626 = vpack.c.bf16 %v2616, %v2615
      %v2627 = vpack.c.bf16 %v2618, %v2617
      %v2628 = vpack.c.bf16 %v2620, %v2619
      %v2637 = vunpack.c.l.b16 %v2621
      %v2638 = vunpack.c.h.b16 %v2621
      %v2639 = vunpack.c.l.b16 %v2622
      %v2640 = vunpack.c.h.b16 %v2622
      %v2641 = vunpack.c.l.b16 %v2623
      %v2642 = vunpack.c.h.b16 %v2623
      %v2643 = vunpack.c.l.b16 %v2624
      %v2644 = vunpack.c.h.b16 %v2624
      %v2645 = vunpack.c.l.b16 %v2625
      %v2646 = vunpack.c.h.b16 %v2625
      %v2647 = vunpack.c.l.b16 %v2626
      %v2648 = vunpack.c.h.b16 %v2626
      %v2649 = vunpack.c.l.b16 %v2627
      %v2650 = vunpack.c.h.b16 %v2627
      %v2651 = vunpack.c.l.b16 %v2628
      %v2652 = vunpack.c.h.b16 %v2628
      %v2653 = vpack.c.b16 %v2637, %v2637
      %v2654 = vpack.c.b16 %v2638, %v2638
      %v2655 = vpack.c.b16 %v2639, %v2639
      %v2656 = vpack.c.b16 %v2640, %v2640
      %v2657 = vpack.c.b16 %v2641, %v2641
      %v2658 = vpack.c.b16 %v2642, %v2642
      %v2659 = vpack.c.b16 %v2643, %v2643
      %v2660 = vpack.c.b16 %v2644, %v2644
      %v2661 = vpack.c.b16 %v2645, %v2645
      %v2662 = vpack.c.b16 %v2646, %v2646
      %v2663 = vpack.c.b16 %v2647, %v2647
      %v2664 = vpack.c.b16 %v2648, %v2648
      %v2665 = vpack.c.b16 %v2649, %v2649
      %v2666 = vpack.c.b16 %v2650, %v2650
      %v2667 = vpack.c.b16 %v2651, %v2651
      %v2668 = vpack.c.b16 %v2652, %v2652
      %2685 = vst [vmem:[%s201] sm:$0xf] %v2653
      %2686 = vst [vmem:[%s201 + $0x4] sm:$0xf] %v2654
      %2687 = vst [vmem:[%s201 + $0x8] sm:$0xf] %v2655
      %2688 = vst [vmem:[%s201 + $0xc] sm:$0xf] %v2656
      %2689 = vst [vmem:[%s201 + $0x10] sm:$0xf] %v2657
      %2690 = vst [vmem:[%s201 + $0x14] sm:$0xf] %v2658
      %2691 = vst [vmem:[%s201 + $0x18] sm:$0xf] %v2659
      %2692 = vst [vmem:[%s201 + $0x1c] sm:$0xf] %v2660
      %2693 = vst [vmem:[%s201 + $0x20] sm:$0xf] %v2661
      %2694 = vst [vmem:[%s201 + $0x24] sm:$0xf] %v2662
      %2695 = vst [vmem:[%s201 + $0x28] sm:$0xf] %v2663
      %2696 = vst [vmem:[%s201 + $0x2c] sm:$0xf] %v2664
      %2697 = vst [vmem:[%s201 + $0x30] sm:$0xf] %v2665
      %2698 = vst [vmem:[%s201 + $0x34] sm:$0xf] %v2666
      %2699 = vst [vmem:[%s201 + $0x38] sm:$0xf] %v2667
      %2700 = vst [vmem:[%s201 + $0x3c] sm:$0xf] %v2668
      %v2701 = vadd.f32 %v2605, %v2606
      %v2702 = vadd.f32 %v2701, %v2607
      %v2703 = vadd.f32 %v2702, %v2608
      %v2704 = vadd.f32 %v2703, %v2609
      %v2705 = vadd.f32 %v2704, %v2610
      %v2706 = vadd.f32 %v2705, %v2611
      %v2707 = vadd.f32 %v2706, %v2612
      %v2708 = vadd.f32 %v2707, %v2613
      %v2709 = vadd.f32 %v2708, %v2614
      %v2710 = vadd.f32 %v2709, %v2615
      %v2711 = vadd.f32 %v2710, %v2616
      %v2712 = vadd.f32 %v2711, %v2617
      %v2713 = vadd.f32 %v2712, %v2618
      %v2714 = vadd.f32 %v2713, %v2619
      %v2715 = vadd.f32 %v2714, %v2620
      %v2716 = vrot.slane %v2715, 4
      %v2717 = vadd.f32 %v2715, %v2716
      %v2718 = vrot.slane %v2717, 2
      %v2719 = vadd.f32 %v2717, %v2718
      %v2720 = vrot.slane %v2719, 1
      %v2721 = vadd.f32 %v2719, %v2720
      %v2722 = vmul.f32 %v2605, %v2605
      %v2723 = vmul.f32 %v2606, %v2606
      %v2724 = vmul.f32 %v2607, %v2607
      %v2725 = vmul.f32 %v2608, %v2608
      %v2726 = vmul.f32 %v2609, %v2609
      %v2727 = vmul.f32 %v2610, %v2610
      %v2728 = vmul.f32 %v2611, %v2611
      %v2729 = vmul.f32 %v2612, %v2612
      %v2730 = vmul.f32 %v2613, %v2613
      %v2731 = vmul.f32 %v2614, %v2614
      %v2732 = vmul.f32 %v2615, %v2615
      %v2733 = vmul.f32 %v2616, %v2616
      %v2734 = vmul.f32 %v2617, %v2617
      %v2735 = vmul.f32 %v2618, %v2618
      %v2736 = vmul.f32 %v2619, %v2619
      %v2737 = vmul.f32 %v2620, %v2620
      %v2738 = vadd.f32 %v2722, %v2723
      %v2739 = vadd.f32 %v2738, %v2724
      %v2740 = vadd.f32 %v2739, %v2725
      %v2741 = vadd.f32 %v2740, %v2726
      %v2742 = vadd.f32 %v2741, %v2727
      %v2743 = vadd.f32 %v2742, %v2728
      %v2744 = vadd.f32 %v2743, %v2729
      %v2745 = vadd.f32 %v2744, %v2730
      %v2746 = vadd.f32 %v2745, %v2731
      %v2747 = vadd.f32 %v2746, %v2732
      %v2748 = vadd.f32 %v2747, %v2733
      %v2749 = vadd.f32 %v2748, %v2734
      %v2750 = vadd.f32 %v2749, %v2735
      %v2751 = vadd.f32 %v2750, %v2736
      %v2752 = vadd.f32 %v2751, %v2737
      %v2753 = vrot.slane %v2752, 4
      %v2754 = vadd.f32 %v2752, %v2753
      %v2755 = vrot.slane %v2754, 2
      %v2756 = vadd.f32 %v2754, %v2755
      %v2757 = vrot.slane %v2756, 1
      %v2758 = vadd.f32 %v2756, %v2757
      %v2759 = vld [vmem:[%s206] sm:$0x3]
      %vm2760 = vcmask 1040384
      %v2761 = vsel %vm2760, %v2721, %v2758
      %v2762 = vadd.f32 %v2759, %v2761
      %2763 = vst [vmem:[%s206] sm:$0x3] %v2762
      %s2764 = smul.u32 8, %s20
      %p2765 = scmp.lt.s32.totalorder %s19, 1
      %s2766 = scalar_select %p2765, %s19, 1
      %p2767 = scmp.lt.s32.totalorder %s2764, 15
      %s2768 = scalar_select %p2767, %s2764, 15
      %s2769 = smul.addr %s2768, 2
      %s2770 = smul.addr %s2766, 32
      %s2771 = sadd.s32 %s2769, %s2770
      %s2772 = smul.addr %s2771, 4
      %s2773 = scalar_lea.vmem %s2, %s2772
      %p2774 = scmp.lt.s32.totalorder %s19, 1
      %s2775 = scalar_select %p2774, %s19, 1
      %s2776 = smul.addr %s2775, 2
      %s2777 = scalar_lea.vmem %s3, %s2776
      // Predicated region
      $region33: #{cna3x3_forward.2} parent=27 // pred_check
        %p2778 = pneg %p94
      $region34: #{cna3x3_forward.2} parent=27 // pred_check_branch
        %2780 = sbr.rel (%p2778) target = $region36
      $region35: #{cna3x3_forward.2} parent=27 // pred_region
        %s2781 = smul.u32 8, %s20
      $region36: #{cna3x3_forward.2} parent=27 // pred_fallthru
        _
      // Predicated region
      $region37: #{cna3x3_forward.2} parent=27 // pred_check
        %p2782 = pneg %p120
      $region38: #{cna3x3_forward.2} parent=27 // pred_check_branch
        %2784 = sbr.rel (%p2782) target = $region40
      $region39: #{cna3x3_forward.2} parent=27 // pred_region
        _
      $region40: #{cna3x3_forward.2} parent=27 // pred_fallthru
        _
    $region28: #{cna3x3_forward.2} parent=5 // pred_fallthru
      _
    %p2785 = scmp.le.s32.totalorder 2, %s10
    // Predicated region
    $region41: #{cna3x3_forward.2} parent=5 // pred_check
      %p2786 = pneg %p2785
    $region42: #{cna3x3_forward.2} parent=5 // pred_check_branch
      %2788 = sbr.rel (%p2786) target = $region44
    $region43: #{cna3x3_forward.2} parent=5 // pred_region
      %s2789 = ssub.s32 %s10, 2
      // Predicated region
      $region45: #{cna3x3_forward.2} parent=43 // pred_check
        %p2790 = pneg %p100
      $region46: #{cna3x3_forward.2} parent=43 // pred_check_branch
        %2792 = sbr.rel (%p2790) target = $region48
      $region47: #{cna3x3_forward.2} parent=43 // pred_region
        %s2793 = smul.u32 8, %s22
        %p2794 = scmp.lt.s32.totalorder %s21, 1
        %s2795 = scalar_select %p2794, %s21, 1
        %p2796 = scmp.lt.s32.totalorder %s2793, 15
        %s2797 = scalar_select %p2796, %s2793, 15
        %s2798 = smul.addr %s2797, 2
        %s2799 = smul.addr %s2795, 32
        %s2800 = sadd.s32 %s2798, %s2799
        %s2801 = smul.addr %s2800, 4
        %s2802 = scalar_lea.vmem %s2, %s2801
      $region48: #{cna3x3_forward.2} parent=43 // pred_fallthru
        _
      // Predicated region
      $region49: #{cna3x3_forward.2} parent=43 // pred_check
        %p2803 = pneg %p126
      $region50: #{cna3x3_forward.2} parent=43 // pred_check_branch
        %2805 = sbr.rel (%p2803) target = $region52
      $region51: #{cna3x3_forward.2} parent=43 // pred_region
        %p2806 = scmp.lt.s32.totalorder %s21, 1
        %s2807 = scalar_select %p2806, %s21, 1
        %s2808 = smul.addr %s2807, 2
        %s2809 = scalar_lea.vmem %s3, %s2808
      $region52: #{cna3x3_forward.2} parent=43 // pred_fallthru
        _
    $region44: #{cna3x3_forward.2} parent=5 // pred_fallthru
      _
  $region6: #{cna3x3_forward.2} parent=0 // loop_footer
    %s14 = sadd.s32 1, %s10
  $region7: #{cna3x3_forward.2} parent=0 // loop_footer_branch
    %9 = sbr.rel target = $region3
  $region8: #{cna3x3_forward.2} parent=0 // loop_exit
    _

</llo_original>
